<compile_context>
chip_gen: v7x
topology: tpu7x:2x2x1
jax: 0.10.0
libtpu: 0.0.40
codegen_flags: <defaults>
</compile_context>

<pallas_src>
import functools
import math

import jax
import jax.numpy as jnp
import numpy as np
from jax.experimental import pallas as pl
from jax.experimental.pallas import tpu as pltpu


def _round_up(x, m):
    return (x + m - 1) // m * m


def _pick_tile_k(k):
    """Class-tile width: one fat lane-dense tile for small heads, 1024-wide
    tiles otherwise (never falls back to 128)."""
    k128 = _round_up(k, 128)
    return k128 if k128 <= 2048 else 1024


# -----------------------------------------------------------------------------
# Prologue kernel: row-wise L2-normalize the ArcMargin weight
# (== F.normalize(weight, dim=1), eps=1e-12), zero padded tail rows, and emit
# it TRANSPOSED as (c, k_pad) bf16 so the main matmul needs no relayout.
# -----------------------------------------------------------------------------
def _weight_norm_t_kernel(w_ref, o_ref, *, k, tile_k):
    w = w_ref[...].astype(jnp.float32)                       # (tile_k, c)
    sumsq = jnp.sum(w * w, axis=-1, keepdims=True)
    inv = jax.lax.rsqrt(jnp.maximum(sumsq, 1e-24))           # 1/max(||w||,1e-12)
    row = (pl.program_id(0) * tile_k
           + jax.lax.broadcasted_iota(jnp.int32, w.shape, 0))
    wn = jnp.where(row < k, w * inv, 0.0)                    # zero padded rows
    o_ref[...] = wn.T.astype(o_ref.dtype)                    # (c, tile_k) bf16


def prepare_arc_weight(weight):
    """F.normalize(weight, dim=1) -> transposed, class-padded bf16 (c, k_pad).

    Pure function of the weight: cache the result and pass it to
    `arc_module_forward(..., weight_nt=...)` to skip per-call renormalization.
    """
    k, c = weight.shape
    tile_k = _pick_tile_k(k)
    k_pad = _round_up(k, tile_k)
    kern = functools.partial(_weight_norm_t_kernel, k=k, tile_k=tile_k)
    vmem_bytes = int(min(2 * (tile_k * c * 4 + c * tile_k * 2) + (8 << 20),
                         56 << 20))
    return pl.pallas_call(
        kern,
        out_shape=jax.ShapeDtypeStruct((c, k_pad), jnp.bfloat16),
        grid=(k_pad // tile_k,),
        in_specs=[pl.BlockSpec((tile_k, c), lambda j: (j, 0))],
        out_specs=pl.BlockSpec((c, tile_k), lambda j: (0, j)),
        compiler_params=pltpu.CompilerParams(
            dimension_semantics=("parallel",),
            vmem_limit_bytes=vmem_bytes),
    )(weight.astype(jnp.float32))


# -----------------------------------------------------------------------------
# Main kernel: cosine matmul (MXU, bf16 in / f32 acc), clamp, additive angular
# margin on the label class, scale by s (folded).  One (TM x TK) tile per step.
# -----------------------------------------------------------------------------
def _arc_margin_kernel(f_ref, wnt_ref, labels_ref, o_ref, *,
                       s, s_cos_m, s_sin_m, s_mm, th, tile_k):
    # cos_th = inputs @ normalize(weight).T : canonical (tm,c)@(c,tk) MXU form.
    cos_th = jnp.dot(f_ref[...], wnt_ref[...],
                     preferred_element_type=jnp.float32)
    cos_th = jnp.clip(cos_th, -1.0, 1.0)
    sin_th = jnp.sqrt(1.0 - cos_th * cos_th)                 # EUP
    s_cos = s * cos_th
    # s folded into the constants; PyTorch's masked re-assign is redundant
    # with this where.
    margin = jnp.where(cos_th > th,
                       cos_th * s_cos_m - sin_th * s_sin_m,
                       s_cos - s_mm)
    # Select the label column with the integer mask directly (no float
    # one-hot); shift the label by the tile's column base, not the iota tile.
    col = jax.lax.broadcasted_iota(jnp.int32, cos_th.shape, 1)
    local_label = labels_ref[...] - pl.program_id(1) * tile_k    # (tile_m, 1)
    o_ref[...] = jnp.where(col == local_label, margin, s_cos).astype(o_ref.dtype)


def arc_module_forward(inputs, labels, weight, *, s=65.0, m=0.5,
                       weight_nt=None, out_dtype=jnp.float32):
    """Pallas TPU forward of ArcModule.

    inputs:  (N, in_features) float   — embeddings.
    labels:  (N,) or (N, 1) int       — target class per row.
    weight:  (out_features, in_features) float — ArcMargin weight.
    weight_nt: optional cached output of prepare_arc_weight(weight).
    Returns (N, out_features) logits (float32 by default).
    """
    if labels.ndim == 1:
        labels = labels[:, None]
    labels = labels.astype(jnp.int32)

    n, c = inputs.shape
    k = weight.shape[0]

    s = float(s)
    cos_m, sin_m = math.cos(m), math.sin(m)
    th = math.cos(math.pi - m)
    mm = math.sin(math.pi - m) * m

    # --- tiling ---------------------------------------------------------------
    if n <= 128:
        tile_m = _round_up(max(n, 8), 8)        # single sublane-aligned batch tile
    else:
        tile_m = 256                            # fill the 256-row MXU (v6e/v7x)
    n_pad = _round_up(n, tile_m)
    tile_k = _pick_tile_k(k)
    k_pad = _round_up(k, tile_k)

    # --- pad batch-sized operands (cheap); weight padding lives in the prologue
    f_pad = jnp.zeros((n_pad, c), jnp.bfloat16).at[:n].set(
        inputs.astype(jnp.bfloat16))
    # Padded rows get label -1 -> never match any class column.
    l_pad = jnp.full((n_pad, 1), -1, jnp.int32).at[:n].set(labels)

    if weight_nt is None:
        weight_nt = prepare_arc_weight(weight)
    assert weight_nt.shape == (c, k_pad), (weight_nt.shape, (c, k_pad))

    grid = (n_pad // tile_m, k_pad // tile_k)
    kern = functools.partial(
        _arc_margin_kernel, s=s, s_cos_m=s * cos_m, s_sin_m=s * sin_m,
        s_mm=s * mm, th=th, tile_k=tile_k)

    out_itemsize = jnp.dtype(out_dtype).itemsize
    blk_bytes = (tile_m * c * 2            # inputs tile (bf16)
                 + c * tile_k * 2          # weight tile (bf16)
                 + tile_m * 128 * 4        # labels tile (padded to a lane)
                 + tile_m * tile_k * out_itemsize)
    vmem_bytes = int(min(2 * blk_bytes + (8 << 20), 56 << 20))

    out = pl.pallas_call(
        kern,
        out_shape=jax.ShapeDtypeStruct((n_pad, k_pad), out_dtype),
        grid=grid,
        in_specs=[
            pl.BlockSpec((tile_m, c), lambda i, j: (i, 0)),     # inputs tile
            pl.BlockSpec((c, tile_k), lambda i, j: (0, j)),     # weight tile
            pl.BlockSpec((tile_m, 1), lambda i, j: (i, 0)),     # labels tile
        ],
        out_specs=pl.BlockSpec((tile_m, tile_k), lambda i, j: (i, j)),
        compiler_params=pltpu.CompilerParams(
            dimension_semantics=("parallel", "parallel"),
            vmem_limit_bytes=vmem_bytes),
        cost_estimate=pl.CostEstimate(
            flops=2 * n_pad * k_pad * c,
            transcendentals=n_pad * k_pad,
            bytes_accessed=(n_pad * c * 2
                            + (n_pad // tile_m) * k_pad * c * 2
                            + n_pad * k_pad * out_itemsize)),
    )(f_pad, weight_nt, l_pad)

    # Drop padded batch rows / padded class columns before any downstream loss.
    return out[:n, :k]


if __name__ == "__main__":
    # Small, deterministic shapes: 8 rows of 128-dim embeddings, 1000 classes
    # (non-multiple of 128 -> exercises class padding and the partial-block
    # weight read in the prologue).
    N, IN_FEATURES, OUT_FEATURES = 8, 128, 1000
    S, M = 65.0, 0.5

    key = jax.random.PRNGKey(0)
    k_in, k_lab, k_w = jax.random.split(key, 3)

    # Upstream ArcNet feeds L2-normalized embeddings; emulate that for realism.
    x = jax.random.normal(k_in, (N, IN_FEATURES), jnp.float32)
    x = x / jnp.linalg.norm(x, axis=-1, keepdims=True)
    labels = jax.random.randint(k_lab, (N,), 0, OUT_FEATURES, jnp.int32)

    # nn.init.xavier_normal_ on (out_features, in_features).
    std = math.sqrt(2.0 / (OUT_FEATURES + IN_FEATURES))
    weight = std * jax.random.normal(k_w, (OUT_FEATURES, IN_FEATURES),
                                     jnp.float32)

    # Per-call path (prologue inside) and cached-weight path must agree.
    logits = arc_module_forward(x, labels, weight, s=S, m=M)
    jax.block_until_ready(logits)
    wn_t = prepare_arc_weight(weight)
    logits_cached = arc_module_forward(x, labels, weight, s=S, m=M,
                                       weight_nt=wn_t)
    jax.block_until_ready(logits_cached)
    assert logits.shape == (N, OUT_FEATURES)
    np.testing.assert_array_equal(np.asarray(logits), np.asarray(logits_cached))

    # Pure-JAX reference (same bf16 MXU operands) to validate the kernel path.
    wn_ref = weight / jnp.maximum(
        jnp.linalg.norm(weight, axis=1, keepdims=True), 1e-12)
    cos_ref = jnp.dot(x.astype(jnp.bfloat16), wn_ref.astype(jnp.bfloat16).T,
                      preferred_element_type=jnp.float32)
    cos_ref = jnp.clip(cos_ref, -1.0, 1.0)
    sin_ref = jnp.sqrt(1.0 - cos_ref * cos_ref)
    cos_ref_m = jnp.where(cos_ref > math.cos(math.pi - M),
                          cos_ref * math.cos(M) - sin_ref * math.sin(M),
                          cos_ref - math.sin(math.pi - M) * M)
    onehot = jax.nn.one_hot(labels, OUT_FEATURES, dtype=jnp.float32)
    ref = S * (onehot * cos_ref_m + (1.0 - onehot) * cos_ref)
    np.testing.assert_allclose(np.asarray(logits), np.asarray(ref),
                               rtol=1e-2, atol=2e-2)

    print("KERNEL_OK")
</pallas_src>

<mosaic_0001>
module attributes {stable_mosaic.version = 11 : i64} {
  func.func @_weight_norm_t_kernel(%arg0: i32, %arg1: memref<1024x128xf32, #tpu.memory_space<vmem>>, %arg2: memref<128x1024xbf16, #tpu.memory_space<vmem>>) attributes {dimension_semantics = [#tpu.dimension_semantics<parallel>], iteration_bounds = array<i64: 1>, scalar_prefetch = 0 : i64, scratch_operands = 0 : i64, tpu.core_type = #tpu.core_type<tc>, window_params = [{transform_indices = @transform_0, window_bounds = array<i64: 1024, 128>}, {transform_indices = @transform_1, window_bounds = array<i64: 128, 1024>}]} {
    %c0 = arith.constant 0 : index
    %c0_0 = arith.constant 0 : index
    %0 = vector.load %arg1[%c0, %c0_0] : memref<1024x128xf32, #tpu.memory_space<vmem>>, vector<1024x128xf32>
    %1 = arith.mulf %0, %0 : vector<1024x128xf32>
    %cst = arith.constant dense<0.000000e+00> : vector<1024xf32>
    %2 = vector.multi_reduction <add>, %1, %cst [1] : vector<1024x128xf32> to vector<1024xf32>
    %3 = vector.shape_cast %2 : vector<1024xf32> to vector<1024x1xf32>
    %cst_1 = arith.constant 1.000000e-24 : f32
    %4 = vector.broadcast %cst_1 : f32 to vector<1024x1xf32>
    %5 = arith.maximumf %3, %4 : vector<1024x1xf32>
    %6 = math.rsqrt %5 : vector<1024x1xf32>
    %c1024_i32 = arith.constant 1024 : i32
    %7 = arith.muli %arg0, %c1024_i32 : i32
    %8 = tpu.iota {dimensions = array<i32: 0>} : vector<1024x128xi32>
    %9 = vector.broadcast %7 : i32 to vector<1024x128xi32>
    %10 = arith.addi %9, %8 : vector<1024x128xi32>
    %c1000_i32 = arith.constant 1000 : i32
    %11 = vector.broadcast %c1000_i32 : i32 to vector<1024x128xi32>
    %12 = arith.cmpi slt, %10, %11 : vector<1024x128xi32>
    %13 = vector.broadcast %6 : vector<1024x1xf32> to vector<1024x128xf32>
    %14 = arith.mulf %0, %13 : vector<1024x128xf32>
    %cst_2 = arith.constant 0.000000e+00 : f32
    %15 = vector.broadcast %cst_2 : f32 to vector<1024x128xf32>
    %16 = arith.select %12, %14, %15 : vector<1024x128xi1>, vector<1024x128xf32>
    %17 = tpu.transpose %16, [1, 0] : vector<1024x128xf32> -> vector<128x1024xf32>
    %18 = arith.truncf %17 : vector<128x1024xf32> to vector<128x1024xbf16>
    %c0_3 = arith.constant 0 : index
    %c0_4 = arith.constant 0 : index
    %19 = vector.load %arg2[%c0_3, %c0_4] : memref<128x1024xbf16, #tpu.memory_space<vmem>>, vector<128x1024xbf16>
    tpu.vector_store %arg2[%c0_3, %c0_4], %18 {strides = array<i32>} : memref<128x1024xbf16, #tpu.memory_space<vmem>>, vector<128x1024xbf16>,
    return
  }
  func.func @transform_0(%arg0: i32) -> (i32, i32) {
    %c0_i32 = arith.constant 0 : i32
    %c0_i32_0 = arith.constant 0 : i32
    return %arg0, %c0_i32 : i32, i32
  }
  func.func @transform_1(%arg0: i32) -> (i32, i32) {
    %c0_i32 = arith.constant 0 : i32
    %c0_i32_0 = arith.constant 0 : i32
    return %c0_i32, %arg0 : i32, i32
  }
}

</mosaic_0001>

<llo_original>
// kernel: tpu_custom_call.1
$region0: #{tpu_custom_call.1}
  #allocation0 [shape = 'u32[]', space=smem, size = 0x4, offset = 0x4, fixed_abs, tag = 'smem constant byte address 0x4 - core index']
  #allocation1 [shape = 'u32[144,128]{1,0:T(1,128)}', space=vmem, size = 0x12000, scoped, tag = 'internal scratch']
  %s0 = inlined_call_operand.hbm [shape: f32[1000,128], index: 0, kind: input, shape index: {}]
  %s1 = inlined_call_operand.hbm [shape: bf16[128,1024], index: 1, kind: output, shape index: {}]
  %s2 = sld [smem:[#allocation0]]
  $region18: #{tpu_custom_call.1} parent=0
    _
  %s4 = ssub.s32 1, %s2
  %s5 = scalar_select 0, %s4, %s2
  $region1: #{tpu_custom_call.1} parent=0
    #allocation2 [shape = 'u8[524288]{0}', space=vmem, size = 0x80000, scoped, tag = 'input window, operand 0, single buffered']
    #allocation3 [shape = 's32[1]{0}', space=sflag, size = 0x4, scoped, tag = 'scoped memory for tpu_custom_call.1']
    #allocation4 [shape = 's32[1]{0}', space=sflag, size = 0x4, scoped, tag = 'scoped memory for tpu_custom_call.1']
    #allocation5 [shape = 'u8[262144]{0}', space=vmem, size = 0x40000, scoped, tag = 'output window, operand 0, single buffered']
    %6 = vsyncpa [#allocation3], 0
    %7 = vsyncpa [#allocation4], 0
    // Predicated region
    $region2: #{tpu_custom_call.1} parent=1 // pred_check
      _
    $region3: #{tpu_custom_call.1} parent=1 // pred_check_branch
      %9 = sbr.rel (0) target = $region5
    $region4: #{tpu_custom_call.1} parent=1 // pred_region
      %s11 = ssub.s32 16384, 16000
      %12 = vsyncadd [#allocation3], %s11
      %s13 = sshll.u32 [#allocation2], 4
      %s14 = int_to_ptr.vmem [resolvable:$true] %s13
      %19 = dma.hbm_to_vmem [thread:$0]  %s0, 16000, %s14, [#allocation3], 128, 128, 8
    $region5: #{tpu_custom_call.1} parent=1 // pred_fallthru
      _
    // Predicated region
    $region6: #{tpu_custom_call.1} parent=1 // pred_check
      _
    $region7: #{tpu_custom_call.1} parent=1 // pred_check_branch
      %21 = sbr.rel (0) target = $region9
    $region8: #{tpu_custom_call.1} parent=1 // pred_region
      %22 = dma.done [#allocation3], 16384
    $region9: #{tpu_custom_call.1} parent=1 // pred_fallthru
      _
    %v23 = vld [vmem:[#allocation2] sm:$0xff]
    %v24 = vld [vmem:[#allocation2 + $0x8] sm:$0xff]
    %v25 = vld [vmem:[#allocation2 + $0x10] sm:$0xff]
    %v26 = vld [vmem:[#allocation2 + $0x18] sm:$0xff]
    %v27 = vld [vmem:[#allocation2 + $0x20] sm:$0xff]
    %v28 = vld [vmem:[#allocation2 + $0x28] sm:$0xff]
    %v29 = vld [vmem:[#allocation2 + $0x30] sm:$0xff]
    %v30 = vld [vmem:[#allocation2 + $0x38] sm:$0xff]
    %v31 = vld [vmem:[#allocation2 + $0x40] sm:$0xff]
    %v32 = vld [vmem:[#allocation2 + $0x48] sm:$0xff]
    %v33 = vld [vmem:[#allocation2 + $0x50] sm:$0xff]
    %v34 = vld [vmem:[#allocation2 + $0x58] sm:$0xff]
    %v35 = vld [vmem:[#allocation2 + $0x60] sm:$0xff]
    %v36 = vld [vmem:[#allocation2 + $0x68] sm:$0xff]
    %v37 = vld [vmem:[#allocation2 + $0x70] sm:$0xff]
    %v38 = vld [vmem:[#allocation2 + $0x78] sm:$0xff]
    %v39 = vld [vmem:[#allocation2 + $0x80] sm:$0xff]
    %v40 = vld [vmem:[#allocation2 + $0x88] sm:$0xff]
    %v41 = vld [vmem:[#allocation2 + $0x90] sm:$0xff]
    %v42 = vld [vmem:[#allocation2 + $0x98] sm:$0xff]
    %v43 = vld [vmem:[#allocation2 + $0xa0] sm:$0xff]
    %v44 = vld [vmem:[#allocation2 + $0xa8] sm:$0xff]
    %v45 = vld [vmem:[#allocation2 + $0xb0] sm:$0xff]
    %v46 = vld [vmem:[#allocation2 + $0xb8] sm:$0xff]
    %v47 = vld [vmem:[#allocation2 + $0xc0] sm:$0xff]
    %v48 = vld [vmem:[#allocation2 + $0xc8] sm:$0xff]
    %v49 = vld [vmem:[#allocation2 + $0xd0] sm:$0xff]
    %v50 = vld [vmem:[#allocation2 + $0xd8] sm:$0xff]
    %v51 = vld [vmem:[#allocation2 + $0xe0] sm:$0xff]
    %v52 = vld [vmem:[#allocation2 + $0xe8] sm:$0xff]
    %v53 = vld [vmem:[#allocation2 + $0xf0] sm:$0xff]
    %v54 = vld [vmem:[#allocation2 + $0xf8] sm:$0xff]
    %v55 = vld [vmem:[#allocation2 + $0x100] sm:$0xff]
    %v56 = vld [vmem:[#allocation2 + $0x108] sm:$0xff]
    %v57 = vld [vmem:[#allocation2 + $0x110] sm:$0xff]
    %v58 = vld [vmem:[#allocation2 + $0x118] sm:$0xff]
    %v59 = vld [vmem:[#allocation2 + $0x120] sm:$0xff]
    %v60 = vld [vmem:[#allocation2 + $0x128] sm:$0xff]
    %v61 = vld [vmem:[#allocation2 + $0x130] sm:$0xff]
    %v62 = vld [vmem:[#allocation2 + $0x138] sm:$0xff]
    %v63 = vld [vmem:[#allocation2 + $0x140] sm:$0xff]
    %v64 = vld [vmem:[#allocation2 + $0x148] sm:$0xff]
    %v65 = vld [vmem:[#allocation2 + $0x150] sm:$0xff]
    %v66 = vld [vmem:[#allocation2 + $0x158] sm:$0xff]
    %v67 = vld [vmem:[#allocation2 + $0x160] sm:$0xff]
    %v68 = vld [vmem:[#allocation2 + $0x168] sm:$0xff]
    %v69 = vld [vmem:[#allocation2 + $0x170] sm:$0xff]
    %v70 = vld [vmem:[#allocation2 + $0x178] sm:$0xff]
    %v71 = vld [vmem:[#allocation2 + $0x180] sm:$0xff]
    %v72 = vld [vmem:[#allocation2 + $0x188] sm:$0xff]
    %v73 = vld [vmem:[#allocation2 + $0x190] sm:$0xff]
    %v74 = vld [vmem:[#allocation2 + $0x198] sm:$0xff]
    %v75 = vld [vmem:[#allocation2 + $0x1a0] sm:$0xff]
    %v76 = vld [vmem:[#allocation2 + $0x1a8] sm:$0xff]
    %v77 = vld [vmem:[#allocation2 + $0x1b0] sm:$0xff]
    %v78 = vld [vmem:[#allocation2 + $0x1b8] sm:$0xff]
    %v79 = vld [vmem:[#allocation2 + $0x1c0] sm:$0xff]
    %v80 = vld [vmem:[#allocation2 + $0x1c8] sm:$0xff]
    %v81 = vld [vmem:[#allocation2 + $0x1d0] sm:$0xff]
    %v82 = vld [vmem:[#allocation2 + $0x1d8] sm:$0xff]
    %v83 = vld [vmem:[#allocation2 + $0x1e0] sm:$0xff]
    %v84 = vld [vmem:[#allocation2 + $0x1e8] sm:$0xff]
    %v85 = vld [vmem:[#allocation2 + $0x1f0] sm:$0xff]
    %v86 = vld [vmem:[#allocation2 + $0x1f8] sm:$0xff]
    %v87 = vld [vmem:[#allocation2 + $0x200] sm:$0xff]
    %v88 = vld [vmem:[#allocation2 + $0x208] sm:$0xff]
    %v89 = vld [vmem:[#allocation2 + $0x210] sm:$0xff]
    %v90 = vld [vmem:[#allocation2 + $0x218] sm:$0xff]
    %v91 = vld [vmem:[#allocation2 + $0x220] sm:$0xff]
    %v92 = vld [vmem:[#allocation2 + $0x228] sm:$0xff]
    %v93 = vld [vmem:[#allocation2 + $0x230] sm:$0xff]
    %v94 = vld [vmem:[#allocation2 + $0x238] sm:$0xff]
    %v95 = vld [vmem:[#allocation2 + $0x240] sm:$0xff]
    %v96 = vld [vmem:[#allocation2 + $0x248] sm:$0xff]
    %v97 = vld [vmem:[#allocation2 + $0x250] sm:$0xff]
    %v98 = vld [vmem:[#allocation2 + $0x258] sm:$0xff]
    %v99 = vld [vmem:[#allocation2 + $0x260] sm:$0xff]
    %v100 = vld [vmem:[#allocation2 + $0x268] sm:$0xff]
    %v101 = vld [vmem:[#allocation2 + $0x270] sm:$0xff]
    %v102 = vld [vmem:[#allocation2 + $0x278] sm:$0xff]
    %v103 = vld [vmem:[#allocation2 + $0x280] sm:$0xff]
    %v104 = vld [vmem:[#allocation2 + $0x288] sm:$0xff]
    %v105 = vld [vmem:[#allocation2 + $0x290] sm:$0xff]
    %v106 = vld [vmem:[#allocation2 + $0x298] sm:$0xff]
    %v107 = vld [vmem:[#allocation2 + $0x2a0] sm:$0xff]
    %v108 = vld [vmem:[#allocation2 + $0x2a8] sm:$0xff]
    %v109 = vld [vmem:[#allocation2 + $0x2b0] sm:$0xff]
    %v110 = vld [vmem:[#allocation2 + $0x2b8] sm:$0xff]
    %v111 = vld [vmem:[#allocation2 + $0x2c0] sm:$0xff]
    %v112 = vld [vmem:[#allocation2 + $0x2c8] sm:$0xff]
    %v113 = vld [vmem:[#allocation2 + $0x2d0] sm:$0xff]
    %v114 = vld [vmem:[#allocation2 + $0x2d8] sm:$0xff]
    %v115 = vld [vmem:[#allocation2 + $0x2e0] sm:$0xff]
    %v116 = vld [vmem:[#allocation2 + $0x2e8] sm:$0xff]
    %v117 = vld [vmem:[#allocation2 + $0x2f0] sm:$0xff]
    %v118 = vld [vmem:[#allocation2 + $0x2f8] sm:$0xff]
    %v119 = vld [vmem:[#allocation2 + $0x300] sm:$0xff]
    %v120 = vld [vmem:[#allocation2 + $0x308] sm:$0xff]
    %v121 = vld [vmem:[#allocation2 + $0x310] sm:$0xff]
    %v122 = vld [vmem:[#allocation2 + $0x318] sm:$0xff]
    %v123 = vld [vmem:[#allocation2 + $0x320] sm:$0xff]
    %v124 = vld [vmem:[#allocation2 + $0x328] sm:$0xff]
    %v125 = vld [vmem:[#allocation2 + $0x330] sm:$0xff]
    %v126 = vld [vmem:[#allocation2 + $0x338] sm:$0xff]
    %v127 = vld [vmem:[#allocation2 + $0x340] sm:$0xff]
    %v128 = vld [vmem:[#allocation2 + $0x348] sm:$0xff]
    %v129 = vld [vmem:[#allocation2 + $0x350] sm:$0xff]
    %v130 = vld [vmem:[#allocation2 + $0x358] sm:$0xff]
    %v131 = vld [vmem:[#allocation2 + $0x360] sm:$0xff]
    %v132 = vld [vmem:[#allocation2 + $0x368] sm:$0xff]
    %v133 = vld [vmem:[#allocation2 + $0x370] sm:$0xff]
    %v134 = vld [vmem:[#allocation2 + $0x378] sm:$0xff]
    %v135 = vld [vmem:[#allocation2 + $0x380] sm:$0xff]
    %v136 = vld [vmem:[#allocation2 + $0x388] sm:$0xff]
    %v137 = vld [vmem:[#allocation2 + $0x390] sm:$0xff]
    %v138 = vld [vmem:[#allocation2 + $0x398] sm:$0xff]
    %v139 = vld [vmem:[#allocation2 + $0x3a0] sm:$0xff]
    %v140 = vld [vmem:[#allocation2 + $0x3a8] sm:$0xff]
    %v141 = vld [vmem:[#allocation2 + $0x3b0] sm:$0xff]
    %v142 = vld [vmem:[#allocation2 + $0x3b8] sm:$0xff]
    %v143 = vld [vmem:[#allocation2 + $0x3c0] sm:$0xff]
    %v144 = vld [vmem:[#allocation2 + $0x3c8] sm:$0xff]
    %v145 = vld [vmem:[#allocation2 + $0x3d0] sm:$0xff]
    %v146 = vld [vmem:[#allocation2 + $0x3d8] sm:$0xff]
    %v147 = vld [vmem:[#allocation2 + $0x3e0] sm:$0xff]
    %v148 = vld [vmem:[#allocation2 + $0x3e8] sm:$0xff]
    %v149 = vld [vmem:[#allocation2 + $0x3f0] sm:$0xff]
    %v150 = vld [vmem:[#allocation2 + $0x3f8] sm:$0xff]
    %v151 = vmul.f32 %v23, %v23
    %v152 = vmul.f32 %v24, %v24
    %v153 = vmul.f32 %v25, %v25
    %v154 = vmul.f32 %v26, %v26
    %v155 = vmul.f32 %v27, %v27
    %v156 = vmul.f32 %v28, %v28
    %v157 = vmul.f32 %v29, %v29
    %v158 = vmul.f32 %v30, %v30
    %v159 = vmul.f32 %v31, %v31
    %v160 = vmul.f32 %v32, %v32
    %v161 = vmul.f32 %v33, %v33
    %v162 = vmul.f32 %v34, %v34
    %v163 = vmul.f32 %v35, %v35
    %v164 = vmul.f32 %v36, %v36
    %v165 = vmul.f32 %v37, %v37
    %v166 = vmul.f32 %v38, %v38
    %v167 = vmul.f32 %v39, %v39
    %v168 = vmul.f32 %v40, %v40
    %v169 = vmul.f32 %v41, %v41
    %v170 = vmul.f32 %v42, %v42
    %v171 = vmul.f32 %v43, %v43
    %v172 = vmul.f32 %v44, %v44
    %v173 = vmul.f32 %v45, %v45
    %v174 = vmul.f32 %v46, %v46
    %v175 = vmul.f32 %v47, %v47
    %v176 = vmul.f32 %v48, %v48
    %v177 = vmul.f32 %v49, %v49
    %v178 = vmul.f32 %v50, %v50
    %v179 = vmul.f32 %v51, %v51
    %v180 = vmul.f32 %v52, %v52
    %v181 = vmul.f32 %v53, %v53
    %v182 = vmul.f32 %v54, %v54
    %v183 = vmul.f32 %v55, %v55
    %v184 = vmul.f32 %v56, %v56
    %v185 = vmul.f32 %v57, %v57
    %v186 = vmul.f32 %v58, %v58
    %v187 = vmul.f32 %v59, %v59
    %v188 = vmul.f32 %v60, %v60
    %v189 = vmul.f32 %v61, %v61
    %v190 = vmul.f32 %v62, %v62
    %v191 = vmul.f32 %v63, %v63
    %v192 = vmul.f32 %v64, %v64
    %v193 = vmul.f32 %v65, %v65
    %v194 = vmul.f32 %v66, %v66
    %v195 = vmul.f32 %v67, %v67
    %v196 = vmul.f32 %v68, %v68
    %v197 = vmul.f32 %v69, %v69
    %v198 = vmul.f32 %v70, %v70
    %v199 = vmul.f32 %v71, %v71
    %v200 = vmul.f32 %v72, %v72
    %v201 = vmul.f32 %v73, %v73
    %v202 = vmul.f32 %v74, %v74
    %v203 = vmul.f32 %v75, %v75
    %v204 = vmul.f32 %v76, %v76
    %v205 = vmul.f32 %v77, %v77
    %v206 = vmul.f32 %v78, %v78
    %v207 = vmul.f32 %v79, %v79
    %v208 = vmul.f32 %v80, %v80
    %v209 = vmul.f32 %v81, %v81
    %v210 = vmul.f32 %v82, %v82
    %v211 = vmul.f32 %v83, %v83
    %v212 = vmul.f32 %v84, %v84
    %v213 = vmul.f32 %v85, %v85
    %v214 = vmul.f32 %v86, %v86
    %v215 = vmul.f32 %v87, %v87
    %v216 = vmul.f32 %v88, %v88
    %v217 = vmul.f32 %v89, %v89
    %v218 = vmul.f32 %v90, %v90
    %v219 = vmul.f32 %v91, %v91
    %v220 = vmul.f32 %v92, %v92
    %v221 = vmul.f32 %v93, %v93
    %v222 = vmul.f32 %v94, %v94
    %v223 = vmul.f32 %v95, %v95
    %v224 = vmul.f32 %v96, %v96
    %v225 = vmul.f32 %v97, %v97
    %v226 = vmul.f32 %v98, %v98
    %v227 = vmul.f32 %v99, %v99
    %v228 = vmul.f32 %v100, %v100
    %v229 = vmul.f32 %v101, %v101
    %v230 = vmul.f32 %v102, %v102
    %v231 = vmul.f32 %v103, %v103
    %v232 = vmul.f32 %v104, %v104
    %v233 = vmul.f32 %v105, %v105
    %v234 = vmul.f32 %v106, %v106
    %v235 = vmul.f32 %v107, %v107
    %v236 = vmul.f32 %v108, %v108
    %v237 = vmul.f32 %v109, %v109
    %v238 = vmul.f32 %v110, %v110
    %v239 = vmul.f32 %v111, %v111
    %v240 = vmul.f32 %v112, %v112
    %v241 = vmul.f32 %v113, %v113
    %v242 = vmul.f32 %v114, %v114
    %v243 = vmul.f32 %v115, %v115
    %v244 = vmul.f32 %v116, %v116
    %v245 = vmul.f32 %v117, %v117
    %v246 = vmul.f32 %v118, %v118
    %v247 = vmul.f32 %v119, %v119
    %v248 = vmul.f32 %v120, %v120
    %v249 = vmul.f32 %v121, %v121
    %v250 = vmul.f32 %v122, %v122
    %v251 = vmul.f32 %v123, %v123
    %v252 = vmul.f32 %v124, %v124
    %v253 = vmul.f32 %v125, %v125
    %v254 = vmul.f32 %v126, %v126
    %v255 = vmul.f32 %v127, %v127
    %v256 = vmul.f32 %v128, %v128
    %v257 = vmul.f32 %v129, %v129
    %v258 = vmul.f32 %v130, %v130
    %v259 = vmul.f32 %v131, %v131
    %v260 = vmul.f32 %v132, %v132
    %v261 = vmul.f32 %v133, %v133
    %v262 = vmul.f32 %v134, %v134
    %v263 = vmul.f32 %v135, %v135
    %v264 = vmul.f32 %v136, %v136
    %v265 = vmul.f32 %v137, %v137
    %v266 = vmul.f32 %v138, %v138
    %v267 = vmul.f32 %v139, %v139
    %v268 = vmul.f32 %v140, %v140
    %v269 = vmul.f32 %v141, %v141
    %v270 = vmul.f32 %v142, %v142
    %v271 = vmul.f32 %v143, %v143
    %v272 = vmul.f32 %v144, %v144
    %v273 = vmul.f32 %v145, %v145
    %v274 = vmul.f32 %v146, %v146
    %v275 = vmul.f32 %v147, %v147
    %v276 = vmul.f32 %v148, %v148
    %v277 = vmul.f32 %v149, %v149
    %v278 = vmul.f32 %v150, %v150
    %279 = vadd.xlane.f32.xlu0 %v151
    %v280 = vpop.xlane.xlu0 %279
    %281 = vadd.xlane.f32.xlu0 %v152
    %v282 = vpop.xlane.xlu0 %281
    %283 = vadd.xlane.f32.xlu0 %v153
    %v284 = vpop.xlane.xlu0 %283
    %285 = vadd.xlane.f32.xlu0 %v154
    %v286 = vpop.xlane.xlu0 %285
    %287 = vadd.xlane.f32.xlu0 %v155
    %v288 = vpop.xlane.xlu0 %287
    %289 = vadd.xlane.f32.xlu0 %v156
    %v290 = vpop.xlane.xlu0 %289
    %291 = vadd.xlane.f32.xlu0 %v157
    %v292 = vpop.xlane.xlu0 %291
    %293 = vadd.xlane.f32.xlu0 %v158
    %v294 = vpop.xlane.xlu0 %293
    %295 = vadd.xlane.f32.xlu0 %v159
    %v296 = vpop.xlane.xlu0 %295
    %297 = vadd.xlane.f32.xlu0 %v160
    %v298 = vpop.xlane.xlu0 %297
    %299 = vadd.xlane.f32.xlu0 %v161
    %v300 = vpop.xlane.xlu0 %299
    %301 = vadd.xlane.f32.xlu0 %v162
    %v302 = vpop.xlane.xlu0 %301
    %303 = vadd.xlane.f32.xlu0 %v163
    %v304 = vpop.xlane.xlu0 %303
    %305 = vadd.xlane.f32.xlu0 %v164
    %v306 = vpop.xlane.xlu0 %305
    %307 = vadd.xlane.f32.xlu0 %v165
    %v308 = vpop.xlane.xlu0 %307
    %309 = vadd.xlane.f32.xlu0 %v166
    %v310 = vpop.xlane.xlu0 %309
    %311 = vadd.xlane.f32.xlu0 %v167
    %v312 = vpop.xlane.xlu0 %311
    %313 = vadd.xlane.f32.xlu0 %v168
    %v314 = vpop.xlane.xlu0 %313
    %315 = vadd.xlane.f32.xlu0 %v169
    %v316 = vpop.xlane.xlu0 %315
    %317 = vadd.xlane.f32.xlu0 %v170
    %v318 = vpop.xlane.xlu0 %317
    %319 = vadd.xlane.f32.xlu0 %v171
    %v320 = vpop.xlane.xlu0 %319
    %321 = vadd.xlane.f32.xlu0 %v172
    %v322 = vpop.xlane.xlu0 %321
    %323 = vadd.xlane.f32.xlu0 %v173
    %v324 = vpop.xlane.xlu0 %323
    %325 = vadd.xlane.f32.xlu0 %v174
    %v326 = vpop.xlane.xlu0 %325
    %327 = vadd.xlane.f32.xlu0 %v175
    %v328 = vpop.xlane.xlu0 %327
    %329 = vadd.xlane.f32.xlu0 %v176
    %v330 = vpop.xlane.xlu0 %329
    %331 = vadd.xlane.f32.xlu0 %v177
    %v332 = vpop.xlane.xlu0 %331
    %333 = vadd.xlane.f32.xlu0 %v178
    %v334 = vpop.xlane.xlu0 %333
    %335 = vadd.xlane.f32.xlu0 %v179
    %v336 = vpop.xlane.xlu0 %335
    %337 = vadd.xlane.f32.xlu0 %v180
    %v338 = vpop.xlane.xlu0 %337
    %339 = vadd.xlane.f32.xlu0 %v181
    %v340 = vpop.xlane.xlu0 %339
    %341 = vadd.xlane.f32.xlu0 %v182
    %v342 = vpop.xlane.xlu0 %341
    %343 = vadd.xlane.f32.xlu0 %v183
    %v344 = vpop.xlane.xlu0 %343
    %345 = vadd.xlane.f32.xlu0 %v184
    %v346 = vpop.xlane.xlu0 %345
    %347 = vadd.xlane.f32.xlu0 %v185
    %v348 = vpop.xlane.xlu0 %347
    %349 = vadd.xlane.f32.xlu0 %v186
    %v350 = vpop.xlane.xlu0 %349
    %351 = vadd.xlane.f32.xlu0 %v187
    %v352 = vpop.xlane.xlu0 %351
    %353 = vadd.xlane.f32.xlu0 %v188
    %v354 = vpop.xlane.xlu0 %353
    %355 = vadd.xlane.f32.xlu0 %v189
    %v356 = vpop.xlane.xlu0 %355
    %357 = vadd.xlane.f32.xlu0 %v190
    %v358 = vpop.xlane.xlu0 %357
    %359 = vadd.xlane.f32.xlu0 %v191
    %v360 = vpop.xlane.xlu0 %359
    %361 = vadd.xlane.f32.xlu0 %v192
    %v362 = vpop.xlane.xlu0 %361
    %363 = vadd.xlane.f32.xlu0 %v193
    %v364 = vpop.xlane.xlu0 %363
    %365 = vadd.xlane.f32.xlu0 %v194
    %v366 = vpop.xlane.xlu0 %365
    %367 = vadd.xlane.f32.xlu0 %v195
    %v368 = vpop.xlane.xlu0 %367
    %369 = vadd.xlane.f32.xlu0 %v196
    %v370 = vpop.xlane.xlu0 %369
    %371 = vadd.xlane.f32.xlu0 %v197
    %v372 = vpop.xlane.xlu0 %371
    %373 = vadd.xlane.f32.xlu0 %v198
    %v374 = vpop.xlane.xlu0 %373
    %375 = vadd.xlane.f32.xlu0 %v199
    %v376 = vpop.xlane.xlu0 %375
    %377 = vadd.xlane.f32.xlu0 %v200
    %v378 = vpop.xlane.xlu0 %377
    %379 = vadd.xlane.f32.xlu0 %v201
    %v380 = vpop.xlane.xlu0 %379
    %381 = vadd.xlane.f32.xlu0 %v202
    %v382 = vpop.xlane.xlu0 %381
    %383 = vadd.xlane.f32.xlu0 %v203
    %v384 = vpop.xlane.xlu0 %383
    %385 = vadd.xlane.f32.xlu0 %v204
    %v386 = vpop.xlane.xlu0 %385
    %387 = vadd.xlane.f32.xlu0 %v205
    %v388 = vpop.xlane.xlu0 %387
    %389 = vadd.xlane.f32.xlu0 %v206
    %v390 = vpop.xlane.xlu0 %389
    %391 = vadd.xlane.f32.xlu0 %v207
    %v392 = vpop.xlane.xlu0 %391
    %393 = vadd.xlane.f32.xlu0 %v208
    %v394 = vpop.xlane.xlu0 %393
    %395 = vadd.xlane.f32.xlu0 %v209
    %v396 = vpop.xlane.xlu0 %395
    %397 = vadd.xlane.f32.xlu0 %v210
    %v398 = vpop.xlane.xlu0 %397
    %399 = vadd.xlane.f32.xlu0 %v211
    %v400 = vpop.xlane.xlu0 %399
    %401 = vadd.xlane.f32.xlu0 %v212
    %v402 = vpop.xlane.xlu0 %401
    %403 = vadd.xlane.f32.xlu0 %v213
    %v404 = vpop.xlane.xlu0 %403
    %405 = vadd.xlane.f32.xlu0 %v214
    %v406 = vpop.xlane.xlu0 %405
    %407 = vadd.xlane.f32.xlu0 %v215
    %v408 = vpop.xlane.xlu0 %407
    %409 = vadd.xlane.f32.xlu0 %v216
    %v410 = vpop.xlane.xlu0 %409
    %411 = vadd.xlane.f32.xlu0 %v217
    %v412 = vpop.xlane.xlu0 %411
    %413 = vadd.xlane.f32.xlu0 %v218
    %v414 = vpop.xlane.xlu0 %413
    %415 = vadd.xlane.f32.xlu0 %v219
    %v416 = vpop.xlane.xlu0 %415
    %417 = vadd.xlane.f32.xlu0 %v220
    %v418 = vpop.xlane.xlu0 %417
    %419 = vadd.xlane.f32.xlu0 %v221
    %v420 = vpop.xlane.xlu0 %419
    %421 = vadd.xlane.f32.xlu0 %v222
    %v422 = vpop.xlane.xlu0 %421
    %423 = vadd.xlane.f32.xlu0 %v223
    %v424 = vpop.xlane.xlu0 %423
    %425 = vadd.xlane.f32.xlu0 %v224
    %v426 = vpop.xlane.xlu0 %425
    %427 = vadd.xlane.f32.xlu0 %v225
    %v428 = vpop.xlane.xlu0 %427
    %429 = vadd.xlane.f32.xlu0 %v226
    %v430 = vpop.xlane.xlu0 %429
    %431 = vadd.xlane.f32.xlu0 %v227
    %v432 = vpop.xlane.xlu0 %431
    %433 = vadd.xlane.f32.xlu0 %v228
    %v434 = vpop.xlane.xlu0 %433
    %435 = vadd.xlane.f32.xlu0 %v229
    %v436 = vpop.xlane.xlu0 %435
    %437 = vadd.xlane.f32.xlu0 %v230
    %v438 = vpop.xlane.xlu0 %437
    %439 = vadd.xlane.f32.xlu0 %v231
    %v440 = vpop.xlane.xlu0 %439
    %441 = vadd.xlane.f32.xlu0 %v232
    %v442 = vpop.xlane.xlu0 %441
    %443 = vadd.xlane.f32.xlu0 %v233
    %v444 = vpop.xlane.xlu0 %443
    %445 = vadd.xlane.f32.xlu0 %v234
    %v446 = vpop.xlane.xlu0 %445
    %447 = vadd.xlane.f32.xlu0 %v235
    %v448 = vpop.xlane.xlu0 %447
    %449 = vadd.xlane.f32.xlu0 %v236
    %v450 = vpop.xlane.xlu0 %449
    %451 = vadd.xlane.f32.xlu0 %v237
    %v452 = vpop.xlane.xlu0 %451
    %453 = vadd.xlane.f32.xlu0 %v238
    %v454 = vpop.xlane.xlu0 %453
    %455 = vadd.xlane.f32.xlu0 %v239
    %v456 = vpop.xlane.xlu0 %455
    %457 = vadd.xlane.f32.xlu0 %v240
    %v458 = vpop.xlane.xlu0 %457
    %459 = vadd.xlane.f32.xlu0 %v241
    %v460 = vpop.xlane.xlu0 %459
    %461 = vadd.xlane.f32.xlu0 %v242
    %v462 = vpop.xlane.xlu0 %461
    %463 = vadd.xlane.f32.xlu0 %v243
    %v464 = vpop.xlane.xlu0 %463
    %465 = vadd.xlane.f32.xlu0 %v244
    %v466 = vpop.xlane.xlu0 %465
    %467 = vadd.xlane.f32.xlu0 %v245
    %v468 = vpop.xlane.xlu0 %467
    %469 = vadd.xlane.f32.xlu0 %v246
    %v470 = vpop.xlane.xlu0 %469
    %471 = vadd.xlane.f32.xlu0 %v247
    %v472 = vpop.xlane.xlu0 %471
    %473 = vadd.xlane.f32.xlu0 %v248
    %v474 = vpop.xlane.xlu0 %473
    %475 = vadd.xlane.f32.xlu0 %v249
    %v476 = vpop.xlane.xlu0 %475
    %477 = vadd.xlane.f32.xlu0 %v250
    %v478 = vpop.xlane.xlu0 %477
    %479 = vadd.xlane.f32.xlu0 %v251
    %v480 = vpop.xlane.xlu0 %479
    %481 = vadd.xlane.f32.xlu0 %v252
    %v482 = vpop.xlane.xlu0 %481
    %483 = vadd.xlane.f32.xlu0 %v253
    %v484 = vpop.xlane.xlu0 %483
    %485 = vadd.xlane.f32.xlu0 %v254
    %v486 = vpop.xlane.xlu0 %485
    %487 = vadd.xlane.f32.xlu0 %v255
    %v488 = vpop.xlane.xlu0 %487
    %489 = vadd.xlane.f32.xlu0 %v256
    %v490 = vpop.xlane.xlu0 %489
    %491 = vadd.xlane.f32.xlu0 %v257
    %v492 = vpop.xlane.xlu0 %491
    %493 = vadd.xlane.f32.xlu0 %v258
    %v494 = vpop.xlane.xlu0 %493
    %495 = vadd.xlane.f32.xlu0 %v259
    %v496 = vpop.xlane.xlu0 %495
    %497 = vadd.xlane.f32.xlu0 %v260
    %v498 = vpop.xlane.xlu0 %497
    %499 = vadd.xlane.f32.xlu0 %v261
    %v500 = vpop.xlane.xlu0 %499
    %501 = vadd.xlane.f32.xlu0 %v262
    %v502 = vpop.xlane.xlu0 %501
    %503 = vadd.xlane.f32.xlu0 %v263
    %v504 = vpop.xlane.xlu0 %503
    %505 = vadd.xlane.f32.xlu0 %v264
    %v506 = vpop.xlane.xlu0 %505
    %507 = vadd.xlane.f32.xlu0 %v265
    %v508 = vpop.xlane.xlu0 %507
    %509 = vadd.xlane.f32.xlu0 %v266
    %v510 = vpop.xlane.xlu0 %509
    %511 = vadd.xlane.f32.xlu0 %v267
    %v512 = vpop.xlane.xlu0 %511
    %513 = vadd.xlane.f32.xlu0 %v268
    %v514 = vpop.xlane.xlu0 %513
    %515 = vadd.xlane.f32.xlu0 %v269
    %v516 = vpop.xlane.xlu0 %515
    %517 = vadd.xlane.f32.xlu0 %v270
    %v518 = vpop.xlane.xlu0 %517
    %519 = vadd.xlane.f32.xlu0 %v271
    %v520 = vpop.xlane.xlu0 %519
    %521 = vadd.xlane.f32.xlu0 %v272
    %v522 = vpop.xlane.xlu0 %521
    %523 = vadd.xlane.f32.xlu0 %v273
    %v524 = vpop.xlane.xlu0 %523
    %525 = vadd.xlane.f32.xlu0 %v274
    %v526 = vpop.xlane.xlu0 %525
    %527 = vadd.xlane.f32.xlu0 %v275
    %v528 = vpop.xlane.xlu0 %527
    %529 = vadd.xlane.f32.xlu0 %v276
    %v530 = vpop.xlane.xlu0 %529
    %531 = vadd.xlane.f32.xlu0 %v277
    %v532 = vpop.xlane.xlu0 %531
    %533 = vadd.xlane.f32.xlu0 %v278
    %v534 = vpop.xlane.xlu0 %533
    %v535 = vmax.f32 %v280, 1e-24
    %v536 = vmax.f32 %v282, 1e-24
    %v537 = vmax.f32 %v284, 1e-24
    %v538 = vmax.f32 %v286, 1e-24
    %v539 = vmax.f32 %v288, 1e-24
    %v540 = vmax.f32 %v290, 1e-24
    %v541 = vmax.f32 %v292, 1e-24
    %v542 = vmax.f32 %v294, 1e-24
    %v543 = vmax.f32 %v296, 1e-24
    %v544 = vmax.f32 %v298, 1e-24
    %v545 = vmax.f32 %v300, 1e-24
    %v546 = vmax.f32 %v302, 1e-24
    %v547 = vmax.f32 %v304, 1e-24
    %v548 = vmax.f32 %v306, 1e-24
    %v549 = vmax.f32 %v308, 1e-24
    %v550 = vmax.f32 %v310, 1e-24
    %v551 = vmax.f32 %v312, 1e-24
    %v552 = vmax.f32 %v314, 1e-24
    %v553 = vmax.f32 %v316, 1e-24
    %v554 = vmax.f32 %v318, 1e-24
    %v555 = vmax.f32 %v320, 1e-24
    %v556 = vmax.f32 %v322, 1e-24
    %v557 = vmax.f32 %v324, 1e-24
    %v558 = vmax.f32 %v326, 1e-24
    %v559 = vmax.f32 %v328, 1e-24
    %v560 = vmax.f32 %v330, 1e-24
    %v561 = vmax.f32 %v332, 1e-24
    %v562 = vmax.f32 %v334, 1e-24
    %v563 = vmax.f32 %v336, 1e-24
    %v564 = vmax.f32 %v338, 1e-24
    %v565 = vmax.f32 %v340, 1e-24
    %v566 = vmax.f32 %v342, 1e-24
    %v567 = vmax.f32 %v344, 1e-24
    %v568 = vmax.f32 %v346, 1e-24
    %v569 = vmax.f32 %v348, 1e-24
    %v570 = vmax.f32 %v350, 1e-24
    %v571 = vmax.f32 %v352, 1e-24
    %v572 = vmax.f32 %v354, 1e-24
    %v573 = vmax.f32 %v356, 1e-24
    %v574 = vmax.f32 %v358, 1e-24
    %v575 = vmax.f32 %v360, 1e-24
    %v576 = vmax.f32 %v362, 1e-24
    %v577 = vmax.f32 %v364, 1e-24
    %v578 = vmax.f32 %v366, 1e-24
    %v579 = vmax.f32 %v368, 1e-24
    %v580 = vmax.f32 %v370, 1e-24
    %v581 = vmax.f32 %v372, 1e-24
    %v582 = vmax.f32 %v374, 1e-24
    %v583 = vmax.f32 %v376, 1e-24
    %v584 = vmax.f32 %v378, 1e-24
    %v585 = vmax.f32 %v380, 1e-24
    %v586 = vmax.f32 %v382, 1e-24
    %v587 = vmax.f32 %v384, 1e-24
    %v588 = vmax.f32 %v386, 1e-24
    %v589 = vmax.f32 %v388, 1e-24
    %v590 = vmax.f32 %v390, 1e-24
    %v591 = vmax.f32 %v392, 1e-24
    %v592 = vmax.f32 %v394, 1e-24
    %v593 = vmax.f32 %v396, 1e-24
    %v594 = vmax.f32 %v398, 1e-24
    %v595 = vmax.f32 %v400, 1e-24
    %v596 = vmax.f32 %v402, 1e-24
    %v597 = vmax.f32 %v404, 1e-24
    %v598 = vmax.f32 %v406, 1e-24
    %v599 = vmax.f32 %v408, 1e-24
    %v600 = vmax.f32 %v410, 1e-24
    %v601 = vmax.f32 %v412, 1e-24
    %v602 = vmax.f32 %v414, 1e-24
    %v603 = vmax.f32 %v416, 1e-24
    %v604 = vmax.f32 %v418, 1e-24
    %v605 = vmax.f32 %v420, 1e-24
    %v606 = vmax.f32 %v422, 1e-24
    %v607 = vmax.f32 %v424, 1e-24
    %v608 = vmax.f32 %v426, 1e-24
    %v609 = vmax.f32 %v428, 1e-24
    %v610 = vmax.f32 %v430, 1e-24
    %v611 = vmax.f32 %v432, 1e-24
    %v612 = vmax.f32 %v434, 1e-24
    %v613 = vmax.f32 %v436, 1e-24
    %v614 = vmax.f32 %v438, 1e-24
    %v615 = vmax.f32 %v440, 1e-24
    %v616 = vmax.f32 %v442, 1e-24
    %v617 = vmax.f32 %v444, 1e-24
    %v618 = vmax.f32 %v446, 1e-24
    %v619 = vmax.f32 %v448, 1e-24
    %v620 = vmax.f32 %v450, 1e-24
    %v621 = vmax.f32 %v452, 1e-24
    %v622 = vmax.f32 %v454, 1e-24
    %v623 = vmax.f32 %v456, 1e-24
    %v624 = vmax.f32 %v458, 1e-24
    %v625 = vmax.f32 %v460, 1e-24
    %v626 = vmax.f32 %v462, 1e-24
    %v627 = vmax.f32 %v464, 1e-24
    %v628 = vmax.f32 %v466, 1e-24
    %v629 = vmax.f32 %v468, 1e-24
    %v630 = vmax.f32 %v470, 1e-24
    %v631 = vmax.f32 %v472, 1e-24
    %v632 = vmax.f32 %v474, 1e-24
    %v633 = vmax.f32 %v476, 1e-24
    %v634 = vmax.f32 %v478, 1e-24
    %v635 = vmax.f32 %v480, 1e-24
    %v636 = vmax.f32 %v482, 1e-24
    %v637 = vmax.f32 %v484, 1e-24
    %v638 = vmax.f32 %v486, 1e-24
    %v639 = vmax.f32 %v488, 1e-24
    %v640 = vmax.f32 %v490, 1e-24
    %v641 = vmax.f32 %v492, 1e-24
    %v642 = vmax.f32 %v494, 1e-24
    %v643 = vmax.f32 %v496, 1e-24
    %v644 = vmax.f32 %v498, 1e-24
    %v645 = vmax.f32 %v500, 1e-24
    %v646 = vmax.f32 %v502, 1e-24
    %v647 = vmax.f32 %v504, 1e-24
    %v648 = vmax.f32 %v506, 1e-24
    %v649 = vmax.f32 %v508, 1e-24
    %v650 = vmax.f32 %v510, 1e-24
    %v651 = vmax.f32 %v512, 1e-24
    %v652 = vmax.f32 %v514, 1e-24
    %v653 = vmax.f32 %v516, 1e-24
    %v654 = vmax.f32 %v518, 1e-24
    %v655 = vmax.f32 %v520, 1e-24
    %v656 = vmax.f32 %v522, 1e-24
    %v657 = vmax.f32 %v524, 1e-24
    %v658 = vmax.f32 %v526, 1e-24
    %v659 = vmax.f32 %v528, 1e-24
    %v660 = vmax.f32 %v530, 1e-24
    %v661 = vmax.f32 %v532, 1e-24
    %v662 = vmax.f32 %v534, 1e-24
    %v663 = vrsqrt.pop %v535
    %v664 = vrsqrt.pop %v536
    %v665 = vrsqrt.pop %v537
    %v666 = vrsqrt.pop %v538
    %v667 = vrsqrt.pop %v539
    %v668 = vrsqrt.pop %v540
    %v669 = vrsqrt.pop %v541
    %v670 = vrsqrt.pop %v542
    %v671 = vrsqrt.pop %v543
    %v672 = vrsqrt.pop %v544
    %v673 = vrsqrt.pop %v545
    %v674 = vrsqrt.pop %v546
    %v675 = vrsqrt.pop %v547
    %v676 = vrsqrt.pop %v548
    %v677 = vrsqrt.pop %v549
    %v678 = vrsqrt.pop %v550
    %v679 = vrsqrt.pop %v551
    %v680 = vrsqrt.pop %v552
    %v681 = vrsqrt.pop %v553
    %v682 = vrsqrt.pop %v554
    %v683 = vrsqrt.pop %v555
    %v684 = vrsqrt.pop %v556
    %v685 = vrsqrt.pop %v557
    %v686 = vrsqrt.pop %v558
    %v687 = vrsqrt.pop %v559
    %v688 = vrsqrt.pop %v560
    %v689 = vrsqrt.pop %v561
    %v690 = vrsqrt.pop %v562
    %v691 = vrsqrt.pop %v563
    %v692 = vrsqrt.pop %v564
    %v693 = vrsqrt.pop %v565
    %v694 = vrsqrt.pop %v566
    %v695 = vrsqrt.pop %v567
    %v696 = vrsqrt.pop %v568
    %v697 = vrsqrt.pop %v569
    %v698 = vrsqrt.pop %v570
    %v699 = vrsqrt.pop %v571
    %v700 = vrsqrt.pop %v572
    %v701 = vrsqrt.pop %v573
    %v702 = vrsqrt.pop %v574
    %v703 = vrsqrt.pop %v575
    %v704 = vrsqrt.pop %v576
    %v705 = vrsqrt.pop %v577
    %v706 = vrsqrt.pop %v578
    %v707 = vrsqrt.pop %v579
    %v708 = vrsqrt.pop %v580
    %v709 = vrsqrt.pop %v581
    %v710 = vrsqrt.pop %v582
    %v711 = vrsqrt.pop %v583
    %v712 = vrsqrt.pop %v584
    %v713 = vrsqrt.pop %v585
    %v714 = vrsqrt.pop %v586
    %v715 = vrsqrt.pop %v587
    %v716 = vrsqrt.pop %v588
    %v717 = vrsqrt.pop %v589
    %v718 = vrsqrt.pop %v590
    %v719 = vrsqrt.pop %v591
    %v720 = vrsqrt.pop %v592
    %v721 = vrsqrt.pop %v593
    %v722 = vrsqrt.pop %v594
    %v723 = vrsqrt.pop %v595
    %v724 = vrsqrt.pop %v596
    %v725 = vrsqrt.pop %v597
    %v726 = vrsqrt.pop %v598
    %v727 = vrsqrt.pop %v599
    %v728 = vrsqrt.pop %v600
    %v729 = vrsqrt.pop %v601
    %v730 = vrsqrt.pop %v602
    %v731 = vrsqrt.pop %v603
    %v732 = vrsqrt.pop %v604
    %v733 = vrsqrt.pop %v605
    %v734 = vrsqrt.pop %v606
    %v735 = vrsqrt.pop %v607
    %v736 = vrsqrt.pop %v608
    %v737 = vrsqrt.pop %v609
    %v738 = vrsqrt.pop %v610
    %v739 = vrsqrt.pop %v611
    %v740 = vrsqrt.pop %v612
    %v741 = vrsqrt.pop %v613
    %v742 = vrsqrt.pop %v614
    %v743 = vrsqrt.pop %v615
    %v744 = vrsqrt.pop %v616
    %v745 = vrsqrt.pop %v617
    %v746 = vrsqrt.pop %v618
    %v747 = vrsqrt.pop %v619
    %v748 = vrsqrt.pop %v620
    %v749 = vrsqrt.pop %v621
    %v750 = vrsqrt.pop %v622
    %v751 = vrsqrt.pop %v623
    %v752 = vrsqrt.pop %v624
    %v753 = vrsqrt.pop %v625
    %v754 = vrsqrt.pop %v626
    %v755 = vrsqrt.pop %v627
    %v756 = vrsqrt.pop %v628
    %v757 = vrsqrt.pop %v629
    %v758 = vrsqrt.pop %v630
    %v759 = vrsqrt.pop %v631
    %v760 = vrsqrt.pop %v632
    %v761 = vrsqrt.pop %v633
    %v762 = vrsqrt.pop %v634
    %v763 = vrsqrt.pop %v635
    %v764 = vrsqrt.pop %v636
    %v765 = vrsqrt.pop %v637
    %v766 = vrsqrt.pop %v638
    %v767 = vrsqrt.pop %v639
    %v768 = vrsqrt.pop %v640
    %v769 = vrsqrt.pop %v641
    %v770 = vrsqrt.pop %v642
    %v771 = vrsqrt.pop %v643
    %v772 = vrsqrt.pop %v644
    %v773 = vrsqrt.pop %v645
    %v774 = vrsqrt.pop %v646
    %v775 = vrsqrt.pop %v647
    %v776 = vrsqrt.pop %v648
    %v777 = vrsqrt.pop %v649
    %v778 = vrsqrt.pop %v650
    %v779 = vrsqrt.pop %v651
    %v780 = vrsqrt.pop %v652
    %v781 = vrsqrt.pop %v653
    %v782 = vrsqrt.pop %v654
    %v783 = vrsqrt.pop %v655
    %v784 = vrsqrt.pop %v656
    %v785 = vrsqrt.pop %v657
    %v786 = vrsqrt.pop %v658
    %v787 = vrsqrt.pop %v659
    %v788 = vrsqrt.pop %v660
    %v789 = vrsqrt.pop %v661
    %v790 = vrsqrt.pop %v662
    %s791 = smul.u32 0, 1024
    %v792 = vlaneseq
    %v793 = vshrl.u32 %v792, 7
    %v794 = vadd.s32 %v793, 8
    %v795 = vadd.s32 %v793, 16
    %v796 = vadd.s32 %v793, 24
    %v797 = vadd.s32 %v793, 32
    %v798 = vadd.s32 %v793, 40
    %v799 = vadd.s32 %v793, 48
    %v800 = vadd.s32 %v793, 56
    %v801 = vadd.s32 %v793, 64
    %v802 = vadd.s32 %v793, 72
    %v803 = vadd.s32 %v793, 80
    %v804 = vadd.s32 %v793, 88
    %v805 = vadd.s32 %v793, 96
    %v806 = vadd.s32 %v793, 104
    %v807 = vadd.s32 %v793, 112
    %v808 = vadd.s32 %v793, 120
    %v809 = vadd.s32 %v793, 128
    %v810 = vadd.s32 %v793, 136
    %v811 = vadd.s32 %v793, 144
    %v812 = vadd.s32 %v793, 152
    %v813 = vadd.s32 %v793, 160
    %v814 = vadd.s32 %v793, 168
    %v815 = vadd.s32 %v793, 176
    %v816 = vadd.s32 %v793, 184
    %v817 = vadd.s32 %v793, 192
    %v818 = vadd.s32 %v793, 200
    %v819 = vadd.s32 %v793, 208
    %v820 = vadd.s32 %v793, 216
    %v821 = vadd.s32 %v793, 224
    %v822 = vadd.s32 %v793, 232
    %v823 = vadd.s32 %v793, 240
    %v824 = vadd.s32 %v793, 248
    %v825 = vadd.s32 %v793, 256
    %v826 = vadd.s32 %v793, 264
    %v827 = vadd.s32 %v793, 272
    %v828 = vadd.s32 %v793, 280
    %v829 = vadd.s32 %v793, 288
    %v830 = vadd.s32 %v793, 296
    %v831 = vadd.s32 %v793, 304
    %v832 = vadd.s32 %v793, 312
    %v833 = vadd.s32 %v793, 320
    %v834 = vadd.s32 %v793, 328
    %v835 = vadd.s32 %v793, 336
    %v836 = vadd.s32 %v793, 344
    %v837 = vadd.s32 %v793, 352
    %v838 = vadd.s32 %v793, 360
    %v839 = vadd.s32 %v793, 368
    %v840 = vadd.s32 %v793, 376
    %v841 = vadd.s32 %v793, 384
    %v842 = vadd.s32 %v793, 392
    %v843 = vadd.s32 %v793, 400
    %v844 = vadd.s32 %v793, 408
    %v845 = vadd.s32 %v793, 416
    %v846 = vadd.s32 %v793, 424
    %v847 = vadd.s32 %v793, 432
    %v848 = vadd.s32 %v793, 440
    %v849 = vadd.s32 %v793, 448
    %v850 = vadd.s32 %v793, 456
    %v851 = vadd.s32 %v793, 464
    %v852 = vadd.s32 %v793, 472
    %v853 = vadd.s32 %v793, 480
    %v854 = vadd.s32 %v793, 488
    %v855 = vadd.s32 %v793, 496
    %v856 = vadd.s32 %v793, 504
    %v857 = vadd.s32 %v793, 512
    %v858 = vadd.s32 %v793, 520
    %v859 = vadd.s32 %v793, 528
    %v860 = vadd.s32 %v793, 536
    %v861 = vadd.s32 %v793, 544
    %v862 = vadd.s32 %v793, 552
    %v863 = vadd.s32 %v793, 560
    %v864 = vadd.s32 %v793, 568
    %v865 = vadd.s32 %v793, 576
    %v866 = vadd.s32 %v793, 584
    %v867 = vadd.s32 %v793, 592
    %v868 = vadd.s32 %v793, 600
    %v869 = vadd.s32 %v793, 608
    %v870 = vadd.s32 %v793, 616
    %v871 = vadd.s32 %v793, 624
    %v872 = vadd.s32 %v793, 632
    %v873 = vadd.s32 %v793, 640
    %v874 = vadd.s32 %v793, 648
    %v875 = vadd.s32 %v793, 656
    %v876 = vadd.s32 %v793, 664
    %v877 = vadd.s32 %v793, 672
    %v878 = vadd.s32 %v793, 680
    %v879 = vadd.s32 %v793, 688
    %v880 = vadd.s32 %v793, 696
    %v881 = vadd.s32 %v793, 704
    %v882 = vadd.s32 %v793, 712
    %v883 = vadd.s32 %v793, 720
    %v884 = vadd.s32 %v793, 728
    %v885 = vadd.s32 %v793, 736
    %v886 = vadd.s32 %v793, 744
    %v887 = vadd.s32 %v793, 752
    %v888 = vadd.s32 %v793, 760
    %v889 = vadd.s32 %v793, 768
    %v890 = vadd.s32 %v793, 776
    %v891 = vadd.s32 %v793, 784
    %v892 = vadd.s32 %v793, 792
    %v893 = vadd.s32 %v793, 800
    %v894 = vadd.s32 %v793, 808
    %v895 = vadd.s32 %v793, 816
    %v896 = vadd.s32 %v793, 824
    %v897 = vadd.s32 %v793, 832
    %v898 = vadd.s32 %v793, 840
    %v899 = vadd.s32 %v793, 848
    %v900 = vadd.s32 %v793, 856
    %v901 = vadd.s32 %v793, 864
    %v902 = vadd.s32 %v793, 872
    %v903 = vadd.s32 %v793, 880
    %v904 = vadd.s32 %v793, 888
    %v905 = vadd.s32 %v793, 896
    %v906 = vadd.s32 %v793, 904
    %v907 = vadd.s32 %v793, 912
    %v908 = vadd.s32 %v793, 920
    %v909 = vadd.s32 %v793, 928
    %v910 = vadd.s32 %v793, 936
    %v911 = vadd.s32 %v793, 944
    %v912 = vadd.s32 %v793, 952
    %v913 = vadd.s32 %v793, 960
    %v914 = vadd.s32 %v793, 968
    %v915 = vadd.s32 %v793, 976
    %v916 = vadd.s32 %v793, 984
    %v917 = vadd.s32 %v793, 992
    %v918 = vadd.s32 %v793, 1000
    %v919 = vadd.s32 %v793, 1008
    %v920 = vadd.s32 %v793, 1016
    %v921 = vstv %s791
    %v922 = vadd.s32 %v921, %v793
    %v923 = vadd.s32 %v921, %v794
    %v924 = vadd.s32 %v921, %v795
    %v925 = vadd.s32 %v921, %v796
    %v926 = vadd.s32 %v921, %v797
    %v927 = vadd.s32 %v921, %v798
    %v928 = vadd.s32 %v921, %v799
    %v929 = vadd.s32 %v921, %v800
    %v930 = vadd.s32 %v921, %v801
    %v931 = vadd.s32 %v921, %v802
    %v932 = vadd.s32 %v921, %v803
    %v933 = vadd.s32 %v921, %v804
    %v934 = vadd.s32 %v921, %v805
    %v935 = vadd.s32 %v921, %v806
    %v936 = vadd.s32 %v921, %v807
    %v937 = vadd.s32 %v921, %v808
    %v938 = vadd.s32 %v921, %v809
    %v939 = vadd.s32 %v921, %v810
    %v940 = vadd.s32 %v921, %v811
    %v941 = vadd.s32 %v921, %v812
    %v942 = vadd.s32 %v921, %v813
    %v943 = vadd.s32 %v921, %v814
    %v944 = vadd.s32 %v921, %v815
    %v945 = vadd.s32 %v921, %v816
    %v946 = vadd.s32 %v921, %v817
    %v947 = vadd.s32 %v921, %v818
    %v948 = vadd.s32 %v921, %v819
    %v949 = vadd.s32 %v921, %v820
    %v950 = vadd.s32 %v921, %v821
    %v951 = vadd.s32 %v921, %v822
    %v952 = vadd.s32 %v921, %v823
    %v953 = vadd.s32 %v921, %v824
    %v954 = vadd.s32 %v921, %v825
    %v955 = vadd.s32 %v921, %v826
    %v956 = vadd.s32 %v921, %v827
    %v957 = vadd.s32 %v921, %v828
    %v958 = vadd.s32 %v921, %v829
    %v959 = vadd.s32 %v921, %v830
    %v960 = vadd.s32 %v921, %v831
    %v961 = vadd.s32 %v921, %v832
    %v962 = vadd.s32 %v921, %v833
    %v963 = vadd.s32 %v921, %v834
    %v964 = vadd.s32 %v921, %v835
    %v965 = vadd.s32 %v921, %v836
    %v966 = vadd.s32 %v921, %v837
    %v967 = vadd.s32 %v921, %v838
    %v968 = vadd.s32 %v921, %v839
    %v969 = vadd.s32 %v921, %v840
    %v970 = vadd.s32 %v921, %v841
    %v971 = vadd.s32 %v921, %v842
    %v972 = vadd.s32 %v921, %v843
    %v973 = vadd.s32 %v921, %v844
    %v974 = vadd.s32 %v921, %v845
    %v975 = vadd.s32 %v921, %v846
    %v976 = vadd.s32 %v921, %v847
    %v977 = vadd.s32 %v921, %v848
    %v978 = vadd.s32 %v921, %v849
    %v979 = vadd.s32 %v921, %v850
    %v980 = vadd.s32 %v921, %v851
    %v981 = vadd.s32 %v921, %v852
    %v982 = vadd.s32 %v921, %v853
    %v983 = vadd.s32 %v921, %v854
    %v984 = vadd.s32 %v921, %v855
    %v985 = vadd.s32 %v921, %v856
    %v986 = vadd.s32 %v921, %v857
    %v987 = vadd.s32 %v921, %v858
    %v988 = vadd.s32 %v921, %v859
    %v989 = vadd.s32 %v921, %v860
    %v990 = vadd.s32 %v921, %v861
    %v991 = vadd.s32 %v921, %v862
    %v992 = vadd.s32 %v921, %v863
    %v993 = vadd.s32 %v921, %v864
    %v994 = vadd.s32 %v921, %v865
    %v995 = vadd.s32 %v921, %v866
    %v996 = vadd.s32 %v921, %v867
    %v997 = vadd.s32 %v921, %v868
    %v998 = vadd.s32 %v921, %v869
    %v999 = vadd.s32 %v921, %v870
    %v1000 = vadd.s32 %v921, %v871
    %v1001 = vadd.s32 %v921, %v872
    %v1002 = vadd.s32 %v921, %v873
    %v1003 = vadd.s32 %v921, %v874
    %v1004 = vadd.s32 %v921, %v875
    %v1005 = vadd.s32 %v921, %v876
    %v1006 = vadd.s32 %v921, %v877
    %v1007 = vadd.s32 %v921, %v878
    %v1008 = vadd.s32 %v921, %v879
    %v1009 = vadd.s32 %v921, %v880
    %v1010 = vadd.s32 %v921, %v881
    %v1011 = vadd.s32 %v921, %v882
    %v1012 = vadd.s32 %v921, %v883
    %v1013 = vadd.s32 %v921, %v884
    %v1014 = vadd.s32 %v921, %v885
    %v1015 = vadd.s32 %v921, %v886
    %v1016 = vadd.s32 %v921, %v887
    %v1017 = vadd.s32 %v921, %v888
    %v1018 = vadd.s32 %v921, %v889
    %v1019 = vadd.s32 %v921, %v890
    %v1020 = vadd.s32 %v921, %v891
    %v1021 = vadd.s32 %v921, %v892
    %v1022 = vadd.s32 %v921, %v893
    %v1023 = vadd.s32 %v921, %v894
    %v1024 = vadd.s32 %v921, %v895
    %v1025 = vadd.s32 %v921, %v896
    %v1026 = vadd.s32 %v921, %v897
    %v1027 = vadd.s32 %v921, %v898
    %v1028 = vadd.s32 %v921, %v899
    %v1029 = vadd.s32 %v921, %v900
    %v1030 = vadd.s32 %v921, %v901
    %v1031 = vadd.s32 %v921, %v902
    %v1032 = vadd.s32 %v921, %v903
    %v1033 = vadd.s32 %v921, %v904
    %v1034 = vadd.s32 %v921, %v905
    %v1035 = vadd.s32 %v921, %v906
    %v1036 = vadd.s32 %v921, %v907
    %v1037 = vadd.s32 %v921, %v908
    %v1038 = vadd.s32 %v921, %v909
    %v1039 = vadd.s32 %v921, %v910
    %v1040 = vadd.s32 %v921, %v911
    %v1041 = vadd.s32 %v921, %v912
    %v1042 = vadd.s32 %v921, %v913
    %v1043 = vadd.s32 %v921, %v914
    %v1044 = vadd.s32 %v921, %v915
    %v1045 = vadd.s32 %v921, %v916
    %v1046 = vadd.s32 %v921, %v917
    %v1047 = vadd.s32 %v921, %v918
    %v1048 = vadd.s32 %v921, %v919
    %v1049 = vadd.s32 %v921, %v920
    %vm1050 = vcmp.lt.s32.totalorder %v922, 1000
    %vm1051 = vcmp.lt.s32.totalorder %v923, 1000
    %vm1052 = vcmp.lt.s32.totalorder %v924, 1000
    %vm1053 = vcmp.lt.s32.totalorder %v925, 1000
    %vm1054 = vcmp.lt.s32.totalorder %v926, 1000
    %vm1055 = vcmp.lt.s32.totalorder %v927, 1000
    %vm1056 = vcmp.lt.s32.totalorder %v928, 1000
    %vm1057 = vcmp.lt.s32.totalorder %v929, 1000
    %vm1058 = vcmp.lt.s32.totalorder %v930, 1000
    %vm1059 = vcmp.lt.s32.totalorder %v931, 1000
    %vm1060 = vcmp.lt.s32.totalorder %v932, 1000
    %vm1061 = vcmp.lt.s32.totalorder %v933, 1000
    %vm1062 = vcmp.lt.s32.totalorder %v934, 1000
    %vm1063 = vcmp.lt.s32.totalorder %v935, 1000
    %vm1064 = vcmp.lt.s32.totalorder %v936, 1000
    %vm1065 = vcmp.lt.s32.totalorder %v937, 1000
    %vm1066 = vcmp.lt.s32.totalorder %v938, 1000
    %vm1067 = vcmp.lt.s32.totalorder %v939, 1000
    %vm1068 = vcmp.lt.s32.totalorder %v940, 1000
    %vm1069 = vcmp.lt.s32.totalorder %v941, 1000
    %vm1070 = vcmp.lt.s32.totalorder %v942, 1000
    %vm1071 = vcmp.lt.s32.totalorder %v943, 1000
    %vm1072 = vcmp.lt.s32.totalorder %v944, 1000
    %vm1073 = vcmp.lt.s32.totalorder %v945, 1000
    %vm1074 = vcmp.lt.s32.totalorder %v946, 1000
    %vm1075 = vcmp.lt.s32.totalorder %v947, 1000
    %vm1076 = vcmp.lt.s32.totalorder %v948, 1000
    %vm1077 = vcmp.lt.s32.totalorder %v949, 1000
    %vm1078 = vcmp.lt.s32.totalorder %v950, 1000
    %vm1079 = vcmp.lt.s32.totalorder %v951, 1000
    %vm1080 = vcmp.lt.s32.totalorder %v952, 1000
    %vm1081 = vcmp.lt.s32.totalorder %v953, 1000
    %vm1082 = vcmp.lt.s32.totalorder %v954, 1000
    %vm1083 = vcmp.lt.s32.totalorder %v955, 1000
    %vm1084 = vcmp.lt.s32.totalorder %v956, 1000
    %vm1085 = vcmp.lt.s32.totalorder %v957, 1000
    %vm1086 = vcmp.lt.s32.totalorder %v958, 1000
    %vm1087 = vcmp.lt.s32.totalorder %v959, 1000
    %vm1088 = vcmp.lt.s32.totalorder %v960, 1000
    %vm1089 = vcmp.lt.s32.totalorder %v961, 1000
    %vm1090 = vcmp.lt.s32.totalorder %v962, 1000
    %vm1091 = vcmp.lt.s32.totalorder %v963, 1000
    %vm1092 = vcmp.lt.s32.totalorder %v964, 1000
    %vm1093 = vcmp.lt.s32.totalorder %v965, 1000
    %vm1094 = vcmp.lt.s32.totalorder %v966, 1000
    %vm1095 = vcmp.lt.s32.totalorder %v967, 1000
    %vm1096 = vcmp.lt.s32.totalorder %v968, 1000
    %vm1097 = vcmp.lt.s32.totalorder %v969, 1000
    %vm1098 = vcmp.lt.s32.totalorder %v970, 1000
    %vm1099 = vcmp.lt.s32.totalorder %v971, 1000
    %vm1100 = vcmp.lt.s32.totalorder %v972, 1000
    %vm1101 = vcmp.lt.s32.totalorder %v973, 1000
    %vm1102 = vcmp.lt.s32.totalorder %v974, 1000
    %vm1103 = vcmp.lt.s32.totalorder %v975, 1000
    %vm1104 = vcmp.lt.s32.totalorder %v976, 1000
    %vm1105 = vcmp.lt.s32.totalorder %v977, 1000
    %vm1106 = vcmp.lt.s32.totalorder %v978, 1000
    %vm1107 = vcmp.lt.s32.totalorder %v979, 1000
    %vm1108 = vcmp.lt.s32.totalorder %v980, 1000
    %vm1109 = vcmp.lt.s32.totalorder %v981, 1000
    %vm1110 = vcmp.lt.s32.totalorder %v982, 1000
    %vm1111 = vcmp.lt.s32.totalorder %v983, 1000
    %vm1112 = vcmp.lt.s32.totalorder %v984, 1000
    %vm1113 = vcmp.lt.s32.totalorder %v985, 1000
    %vm1114 = vcmp.lt.s32.totalorder %v986, 1000
    %vm1115 = vcmp.lt.s32.totalorder %v987, 1000
    %vm1116 = vcmp.lt.s32.totalorder %v988, 1000
    %vm1117 = vcmp.lt.s32.totalorder %v989, 1000
    %vm1118 = vcmp.lt.s32.totalorder %v990, 1000
    %vm1119 = vcmp.lt.s32.totalorder %v991, 1000
    %vm1120 = vcmp.lt.s32.totalorder %v992, 1000
    %vm1121 = vcmp.lt.s32.totalorder %v993, 1000
    %vm1122 = vcmp.lt.s32.totalorder %v994, 1000
    %vm1123 = vcmp.lt.s32.totalorder %v995, 1000
    %vm1124 = vcmp.lt.s32.totalorder %v996, 1000
    %vm1125 = vcmp.lt.s32.totalorder %v997, 1000
    %vm1126 = vcmp.lt.s32.totalorder %v998, 1000
    %vm1127 = vcmp.lt.s32.totalorder %v999, 1000
    %vm1128 = vcmp.lt.s32.totalorder %v1000, 1000
    %vm1129 = vcmp.lt.s32.totalorder %v1001, 1000
    %vm1130 = vcmp.lt.s32.totalorder %v1002, 1000
    %vm1131 = vcmp.lt.s32.totalorder %v1003, 1000
    %vm1132 = vcmp.lt.s32.totalorder %v1004, 1000
    %vm1133 = vcmp.lt.s32.totalorder %v1005, 1000
    %vm1134 = vcmp.lt.s32.totalorder %v1006, 1000
    %vm1135 = vcmp.lt.s32.totalorder %v1007, 1000
    %vm1136 = vcmp.lt.s32.totalorder %v1008, 1000
    %vm1137 = vcmp.lt.s32.totalorder %v1009, 1000
    %vm1138 = vcmp.lt.s32.totalorder %v1010, 1000
    %vm1139 = vcmp.lt.s32.totalorder %v1011, 1000
    %vm1140 = vcmp.lt.s32.totalorder %v1012, 1000
    %vm1141 = vcmp.lt.s32.totalorder %v1013, 1000
    %vm1142 = vcmp.lt.s32.totalorder %v1014, 1000
    %vm1143 = vcmp.lt.s32.totalorder %v1015, 1000
    %vm1144 = vcmp.lt.s32.totalorder %v1016, 1000
    %vm1145 = vcmp.lt.s32.totalorder %v1017, 1000
    %vm1146 = vcmp.lt.s32.totalorder %v1018, 1000
    %vm1147 = vcmp.lt.s32.totalorder %v1019, 1000
    %vm1148 = vcmp.lt.s32.totalorder %v1020, 1000
    %vm1149 = vcmp.lt.s32.totalorder %v1021, 1000
    %vm1150 = vcmp.lt.s32.totalorder %v1022, 1000
    %vm1151 = vcmp.lt.s32.totalorder %v1023, 1000
    %vm1152 = vcmp.lt.s32.totalorder %v1024, 1000
    %vm1153 = vcmp.lt.s32.totalorder %v1025, 1000
    %vm1154 = vcmp.lt.s32.totalorder %v1026, 1000
    %vm1155 = vcmp.lt.s32.totalorder %v1027, 1000
    %vm1156 = vcmp.lt.s32.totalorder %v1028, 1000
    %vm1157 = vcmp.lt.s32.totalorder %v1029, 1000
    %vm1158 = vcmp.lt.s32.totalorder %v1030, 1000
    %vm1159 = vcmp.lt.s32.totalorder %v1031, 1000
    %vm1160 = vcmp.lt.s32.totalorder %v1032, 1000
    %vm1161 = vcmp.lt.s32.totalorder %v1033, 1000
    %vm1162 = vcmp.lt.s32.totalorder %v1034, 1000
    %vm1163 = vcmp.lt.s32.totalorder %v1035, 1000
    %vm1164 = vcmp.lt.s32.totalorder %v1036, 1000
    %vm1165 = vcmp.lt.s32.totalorder %v1037, 1000
    %vm1166 = vcmp.lt.s32.totalorder %v1038, 1000
    %vm1167 = vcmp.lt.s32.totalorder %v1039, 1000
    %vm1168 = vcmp.lt.s32.totalorder %v1040, 1000
    %vm1169 = vcmp.lt.s32.totalorder %v1041, 1000
    %vm1170 = vcmp.lt.s32.totalorder %v1042, 1000
    %vm1171 = vcmp.lt.s32.totalorder %v1043, 1000
    %vm1172 = vcmp.lt.s32.totalorder %v1044, 1000
    %vm1173 = vcmp.lt.s32.totalorder %v1045, 1000
    %vm1174 = vcmp.lt.s32.totalorder %v1046, 1000
    %vm1175 = vcmp.lt.s32.totalorder %v1047, 1000
    %vm1176 = vcmp.lt.s32.totalorder %v1048, 1000
    %vm1177 = vcmp.lt.s32.totalorder %v1049, 1000
    %v1178 = vmul.f32 %v23, %v663
    %v1179 = vmul.f32 %v24, %v664
    %v1180 = vmul.f32 %v25, %v665
    %v1181 = vmul.f32 %v26, %v666
    %v1182 = vmul.f32 %v27, %v667
    %v1183 = vmul.f32 %v28, %v668
    %v1184 = vmul.f32 %v29, %v669
    %v1185 = vmul.f32 %v30, %v670
    %v1186 = vmul.f32 %v31, %v671
    %v1187 = vmul.f32 %v32, %v672
    %v1188 = vmul.f32 %v33, %v673
    %v1189 = vmul.f32 %v34, %v674
    %v1190 = vmul.f32 %v35, %v675
    %v1191 = vmul.f32 %v36, %v676
    %v1192 = vmul.f32 %v37, %v677
    %v1193 = vmul.f32 %v38, %v678
    %v1194 = vmul.f32 %v39, %v679
    %v1195 = vmul.f32 %v40, %v680
    %v1196 = vmul.f32 %v41, %v681
    %v1197 = vmul.f32 %v42, %v682
    %v1198 = vmul.f32 %v43, %v683
    %v1199 = vmul.f32 %v44, %v684
    %v1200 = vmul.f32 %v45, %v685
    %v1201 = vmul.f32 %v46, %v686
    %v1202 = vmul.f32 %v47, %v687
    %v1203 = vmul.f32 %v48, %v688
    %v1204 = vmul.f32 %v49, %v689
    %v1205 = vmul.f32 %v50, %v690
    %v1206 = vmul.f32 %v51, %v691
    %v1207 = vmul.f32 %v52, %v692
    %v1208 = vmul.f32 %v53, %v693
    %v1209 = vmul.f32 %v54, %v694
    %v1210 = vmul.f32 %v55, %v695
    %v1211 = vmul.f32 %v56, %v696
    %v1212 = vmul.f32 %v57, %v697
    %v1213 = vmul.f32 %v58, %v698
    %v1214 = vmul.f32 %v59, %v699
    %v1215 = vmul.f32 %v60, %v700
    %v1216 = vmul.f32 %v61, %v701
    %v1217 = vmul.f32 %v62, %v702
    %v1218 = vmul.f32 %v63, %v703
    %v1219 = vmul.f32 %v64, %v704
    %v1220 = vmul.f32 %v65, %v705
    %v1221 = vmul.f32 %v66, %v706
    %v1222 = vmul.f32 %v67, %v707
    %v1223 = vmul.f32 %v68, %v708
    %v1224 = vmul.f32 %v69, %v709
    %v1225 = vmul.f32 %v70, %v710
    %v1226 = vmul.f32 %v71, %v711
    %v1227 = vmul.f32 %v72, %v712
    %v1228 = vmul.f32 %v73, %v713
    %v1229 = vmul.f32 %v74, %v714
    %v1230 = vmul.f32 %v75, %v715
    %v1231 = vmul.f32 %v76, %v716
    %v1232 = vmul.f32 %v77, %v717
    %v1233 = vmul.f32 %v78, %v718
    %v1234 = vmul.f32 %v79, %v719
    %v1235 = vmul.f32 %v80, %v720
    %v1236 = vmul.f32 %v81, %v721
    %v1237 = vmul.f32 %v82, %v722
    %v1238 = vmul.f32 %v83, %v723
    %v1239 = vmul.f32 %v84, %v724
    %v1240 = vmul.f32 %v85, %v725
    %v1241 = vmul.f32 %v86, %v726
    %v1242 = vmul.f32 %v87, %v727
    %v1243 = vmul.f32 %v88, %v728
    %v1244 = vmul.f32 %v89, %v729
    %v1245 = vmul.f32 %v90, %v730
    %v1246 = vmul.f32 %v91, %v731
    %v1247 = vmul.f32 %v92, %v732
    %v1248 = vmul.f32 %v93, %v733
    %v1249 = vmul.f32 %v94, %v734
    %v1250 = vmul.f32 %v95, %v735
    %v1251 = vmul.f32 %v96, %v736
    %v1252 = vmul.f32 %v97, %v737
    %v1253 = vmul.f32 %v98, %v738
    %v1254 = vmul.f32 %v99, %v739
    %v1255 = vmul.f32 %v100, %v740
    %v1256 = vmul.f32 %v101, %v741
    %v1257 = vmul.f32 %v102, %v742
    %v1258 = vmul.f32 %v103, %v743
    %v1259 = vmul.f32 %v104, %v744
    %v1260 = vmul.f32 %v105, %v745
    %v1261 = vmul.f32 %v106, %v746
    %v1262 = vmul.f32 %v107, %v747
    %v1263 = vmul.f32 %v108, %v748
    %v1264 = vmul.f32 %v109, %v749
    %v1265 = vmul.f32 %v110, %v750
    %v1266 = vmul.f32 %v111, %v751
    %v1267 = vmul.f32 %v112, %v752
    %v1268 = vmul.f32 %v113, %v753
    %v1269 = vmul.f32 %v114, %v754
    %v1270 = vmul.f32 %v115, %v755
    %v1271 = vmul.f32 %v116, %v756
    %v1272 = vmul.f32 %v117, %v757
    %v1273 = vmul.f32 %v118, %v758
    %v1274 = vmul.f32 %v119, %v759
    %v1275 = vmul.f32 %v120, %v760
    %v1276 = vmul.f32 %v121, %v761
    %v1277 = vmul.f32 %v122, %v762
    %v1278 = vmul.f32 %v123, %v763
    %v1279 = vmul.f32 %v124, %v764
    %v1280 = vmul.f32 %v125, %v765
    %v1281 = vmul.f32 %v126, %v766
    %v1282 = vmul.f32 %v127, %v767
    %v1283 = vmul.f32 %v128, %v768
    %v1284 = vmul.f32 %v129, %v769
    %v1285 = vmul.f32 %v130, %v770
    %v1286 = vmul.f32 %v131, %v771
    %v1287 = vmul.f32 %v132, %v772
    %v1288 = vmul.f32 %v133, %v773
    %v1289 = vmul.f32 %v134, %v774
    %v1290 = vmul.f32 %v135, %v775
    %v1291 = vmul.f32 %v136, %v776
    %v1292 = vmul.f32 %v137, %v777
    %v1293 = vmul.f32 %v138, %v778
    %v1294 = vmul.f32 %v139, %v779
    %v1295 = vmul.f32 %v140, %v780
    %v1296 = vmul.f32 %v141, %v781
    %v1297 = vmul.f32 %v142, %v782
    %v1298 = vmul.f32 %v143, %v783
    %v1299 = vmul.f32 %v144, %v784
    %v1300 = vmul.f32 %v145, %v785
    %v1301 = vmul.f32 %v146, %v786
    %v1302 = vmul.f32 %v147, %v787
    %v1303 = vmul.f32 %v148, %v788
    %v1304 = vmul.f32 %v149, %v789
    %v1305 = vmul.f32 %v150, %v790
    %v1306 = vsel %vm1050, %v1178, 0.0
    %v1307 = vsel %vm1051, %v1179, 0.0
    %v1308 = vsel %vm1052, %v1180, 0.0
    %v1309 = vsel %vm1053, %v1181, 0.0
    %v1310 = vsel %vm1054, %v1182, 0.0
    %v1311 = vsel %vm1055, %v1183, 0.0
    %v1312 = vsel %vm1056, %v1184, 0.0
    %v1313 = vsel %vm1057, %v1185, 0.0
    %v1314 = vsel %vm1058, %v1186, 0.0
    %v1315 = vsel %vm1059, %v1187, 0.0
    %v1316 = vsel %vm1060, %v1188, 0.0
    %v1317 = vsel %vm1061, %v1189, 0.0
    %v1318 = vsel %vm1062, %v1190, 0.0
    %v1319 = vsel %vm1063, %v1191, 0.0
    %v1320 = vsel %vm1064, %v1192, 0.0
    %v1321 = vsel %vm1065, %v1193, 0.0
    %v1322 = vsel %vm1066, %v1194, 0.0
    %v1323 = vsel %vm1067, %v1195, 0.0
    %v1324 = vsel %vm1068, %v1196, 0.0
    %v1325 = vsel %vm1069, %v1197, 0.0
    %v1326 = vsel %vm1070, %v1198, 0.0
    %v1327 = vsel %vm1071, %v1199, 0.0
    %v1328 = vsel %vm1072, %v1200, 0.0
    %v1329 = vsel %vm1073, %v1201, 0.0
    %v1330 = vsel %vm1074, %v1202, 0.0
    %v1331 = vsel %vm1075, %v1203, 0.0
    %v1332 = vsel %vm1076, %v1204, 0.0
    %v1333 = vsel %vm1077, %v1205, 0.0
    %v1334 = vsel %vm1078, %v1206, 0.0
    %v1335 = vsel %vm1079, %v1207, 0.0
    %v1336 = vsel %vm1080, %v1208, 0.0
    %v1337 = vsel %vm1081, %v1209, 0.0
    %v1338 = vsel %vm1082, %v1210, 0.0
    %v1339 = vsel %vm1083, %v1211, 0.0
    %v1340 = vsel %vm1084, %v1212, 0.0
    %v1341 = vsel %vm1085, %v1213, 0.0
    %v1342 = vsel %vm1086, %v1214, 0.0
    %v1343 = vsel %vm1087, %v1215, 0.0
    %v1344 = vsel %vm1088, %v1216, 0.0
    %v1345 = vsel %vm1089, %v1217, 0.0
    %v1346 = vsel %vm1090, %v1218, 0.0
    %v1347 = vsel %vm1091, %v1219, 0.0
    %v1348 = vsel %vm1092, %v1220, 0.0
    %v1349 = vsel %vm1093, %v1221, 0.0
    %v1350 = vsel %vm1094, %v1222, 0.0
    %v1351 = vsel %vm1095, %v1223, 0.0
    %v1352 = vsel %vm1096, %v1224, 0.0
    %v1353 = vsel %vm1097, %v1225, 0.0
    %v1354 = vsel %vm1098, %v1226, 0.0
    %v1355 = vsel %vm1099, %v1227, 0.0
    %v1356 = vsel %vm1100, %v1228, 0.0
    %v1357 = vsel %vm1101, %v1229, 0.0
    %v1358 = vsel %vm1102, %v1230, 0.0
    %v1359 = vsel %vm1103, %v1231, 0.0
    %v1360 = vsel %vm1104, %v1232, 0.0
    %v1361 = vsel %vm1105, %v1233, 0.0
    %v1362 = vsel %vm1106, %v1234, 0.0
    %v1363 = vsel %vm1107, %v1235, 0.0
    %v1364 = vsel %vm1108, %v1236, 0.0
    %v1365 = vsel %vm1109, %v1237, 0.0
    %v1366 = vsel %vm1110, %v1238, 0.0
    %v1367 = vsel %vm1111, %v1239, 0.0
    %v1368 = vsel %vm1112, %v1240, 0.0
    %v1369 = vsel %vm1113, %v1241, 0.0
    %v1370 = vsel %vm1114, %v1242, 0.0
    %v1371 = vsel %vm1115, %v1243, 0.0
    %v1372 = vsel %vm1116, %v1244, 0.0
    %v1373 = vsel %vm1117, %v1245, 0.0
    %v1374 = vsel %vm1118, %v1246, 0.0
    %v1375 = vsel %vm1119, %v1247, 0.0
    %v1376 = vsel %vm1120, %v1248, 0.0
    %v1377 = vsel %vm1121, %v1249, 0.0
    %v1378 = vsel %vm1122, %v1250, 0.0
    %v1379 = vsel %vm1123, %v1251, 0.0
    %v1380 = vsel %vm1124, %v1252, 0.0
    %v1381 = vsel %vm1125, %v1253, 0.0
    %v1382 = vsel %vm1126, %v1254, 0.0
    %v1383 = vsel %vm1127, %v1255, 0.0
    %v1384 = vsel %vm1128, %v1256, 0.0
    %v1385 = vsel %vm1129, %v1257, 0.0
    %v1386 = vsel %vm1130, %v1258, 0.0
    %v1387 = vsel %vm1131, %v1259, 0.0
    %v1388 = vsel %vm1132, %v1260, 0.0
    %v1389 = vsel %vm1133, %v1261, 0.0
    %v1390 = vsel %vm1134, %v1262, 0.0
    %v1391 = vsel %vm1135, %v1263, 0.0
    %v1392 = vsel %vm1136, %v1264, 0.0
    %v1393 = vsel %vm1137, %v1265, 0.0
    %v1394 = vsel %vm1138, %v1266, 0.0
    %v1395 = vsel %vm1139, %v1267, 0.0
    %v1396 = vsel %vm1140, %v1268, 0.0
    %v1397 = vsel %vm1141, %v1269, 0.0
    %v1398 = vsel %vm1142, %v1270, 0.0
    %v1399 = vsel %vm1143, %v1271, 0.0
    %v1400 = vsel %vm1144, %v1272, 0.0
    %v1401 = vsel %vm1145, %v1273, 0.0
    %v1402 = vsel %vm1146, %v1274, 0.0
    %v1403 = vsel %vm1147, %v1275, 0.0
    %v1404 = vsel %vm1148, %v1276, 0.0
    %v1405 = vsel %vm1149, %v1277, 0.0
    %v1406 = vsel %vm1150, %v1278, 0.0
    %v1407 = vsel %vm1151, %v1279, 0.0
    %v1408 = vsel %vm1152, %v1280, 0.0
    %v1409 = vsel %vm1153, %v1281, 0.0
    %v1410 = vsel %vm1154, %v1282, 0.0
    %v1411 = vsel %vm1155, %v1283, 0.0
    %v1412 = vsel %vm1156, %v1284, 0.0
    %v1413 = vsel %vm1157, %v1285, 0.0
    %v1414 = vsel %vm1158, %v1286, 0.0
    %v1415 = vsel %vm1159, %v1287, 0.0
    %v1416 = vsel %vm1160, %v1288, 0.0
    %v1417 = vsel %vm1161, %v1289, 0.0
    %v1418 = vsel %vm1162, %v1290, 0.0
    %v1419 = vsel %vm1163, %v1291, 0.0
    %v1420 = vsel %vm1164, %v1292, 0.0
    %v1421 = vsel %vm1165, %v1293, 0.0
    %v1422 = vsel %vm1166, %v1294, 0.0
    %v1423 = vsel %vm1167, %v1295, 0.0
    %v1424 = vsel %vm1168, %v1296, 0.0
    %v1425 = vsel %vm1169, %v1297, 0.0
    %v1426 = vsel %vm1170, %v1298, 0.0
    %v1427 = vsel %vm1171, %v1299, 0.0
    %v1428 = vsel %vm1172, %v1300, 0.0
    %v1429 = vsel %vm1173, %v1301, 0.0
    %v1430 = vsel %vm1174, %v1302, 0.0
    %v1431 = vsel %vm1175, %v1303, 0.0
    %v1432 = vsel %vm1176, %v1304, 0.0
    %v1433 = vsel %vm1177, %v1305, 0.0
    %1434 = vxpose.xlu0.b32.start [1/16] %v1306, 128
    %1435 = vxpose.xlu0.b32.cont [2/16] %v1307, 128
    %1436 = vxpose.xlu0.b32.cont [3/16] %v1308, 128
    %1437 = vxpose.xlu0.b32.cont [4/16] %v1309, 128
    %1438 = vxpose.xlu0.b32.cont [5/16] %v1310, 128
    %1439 = vxpose.xlu0.b32.cont [6/16] %v1311, 128
    %1440 = vxpose.xlu0.b32.cont [7/16] %v1312, 128
    %1441 = vxpose.xlu0.b32.cont [8/16] %v1313, 128
    %1442 = vxpose.xlu0.b32.cont [9/16] %v1314, 128
    %1443 = vxpose.xlu0.b32.cont [10/16] %v1315, 128
    %1444 = vxpose.xlu0.b32.cont [11/16] %v1316, 128
    %1445 = vxpose.xlu0.b32.cont [12/16] %v1317, 128
    %1446 = vxpose.xlu0.b32.cont [13/16] %v1318, 128
    %1447 = vxpose.xlu0.b32.cont [14/16] %v1319, 128
    %1448 = vxpose.xlu0.b32.cont [15/16] %v1320, 128
    %1449 = vxpose.xlu0.b32.end [16/16] %v1321, 128
    %v1450 = vpop.trf.xlu0
    %v1451 = vpop.trf.xlu0
    %v1452 = vpop.trf.xlu0
    %v1453 = vpop.trf.xlu0
    %v1454 = vpop.trf.xlu0
    %v1455 = vpop.trf.xlu0
    %v1456 = vpop.trf.xlu0
    %v1457 = vpop.trf.xlu0
    %v1458 = vpop.trf.xlu0
    %v1459 = vpop.trf.xlu0
    %v1460 = vpop.trf.xlu0
    %v1461 = vpop.trf.xlu0
    %v1462 = vpop.trf.xlu0
    %v1463 = vpop.trf.xlu0
    %v1464 = vpop.trf.xlu0
    %v1465 = vpop.trf.xlu0
    %1466 = vxpose.xlu0.b32.start [1/16] %v1322, 128
    %1467 = vxpose.xlu0.b32.cont [2/16] %v1323, 128
    %1468 = vxpose.xlu0.b32.cont [3/16] %v1324, 128
    %1469 = vxpose.xlu0.b32.cont [4/16] %v1325, 128
    %1470 = vxpose.xlu0.b32.cont [5/16] %v1326, 128
    %1471 = vxpose.xlu0.b32.cont [6/16] %v1327, 128
    %1472 = vxpose.xlu0.b32.cont [7/16] %v1328, 128
    %1473 = vxpose.xlu0.b32.cont [8/16] %v1329, 128
    %1474 = vxpose.xlu0.b32.cont [9/16] %v1330, 128
    %1475 = vxpose.xlu0.b32.cont [10/16] %v1331, 128
    %1476 = vxpose.xlu0.b32.cont [11/16] %v1332, 128
    %1477 = vxpose.xlu0.b32.cont [12/16] %v1333, 128
    %1478 = vxpose.xlu0.b32.cont [13/16] %v1334, 128
    %1479 = vxpose.xlu0.b32.cont [14/16] %v1335, 128
    %1480 = vxpose.xlu0.b32.cont [15/16] %v1336, 128
    %1481 = vxpose.xlu0.b32.end [16/16] %v1337, 128
    %v1482 = vpop.trf.xlu0
    %v1483 = vpop.trf.xlu0
    %v1484 = vpop.trf.xlu0
    %v1485 = vpop.trf.xlu0
    %v1486 = vpop.trf.xlu0
    %v1487 = vpop.trf.xlu0
    %v1488 = vpop.trf.xlu0
    %v1489 = vpop.trf.xlu0
    %v1490 = vpop.trf.xlu0
    %v1491 = vpop.trf.xlu0
    %v1492 = vpop.trf.xlu0
    %v1493 = vpop.trf.xlu0
    %v1494 = vpop.trf.xlu0
    %v1495 = vpop.trf.xlu0
    %v1496 = vpop.trf.xlu0
    %v1497 = vpop.trf.xlu0
    %1498 = vxpose.xlu0.b32.start [1/16] %v1338, 128
    %1499 = vxpose.xlu0.b32.cont [2/16] %v1339, 128
    %1500 = vxpose.xlu0.b32.cont [3/16] %v1340, 128
    %1501 = vxpose.xlu0.b32.cont [4/16] %v1341, 128
    %1502 = vxpose.xlu0.b32.cont [5/16] %v1342, 128
    %1503 = vxpose.xlu0.b32.cont [6/16] %v1343, 128
    %1504 = vxpose.xlu0.b32.cont [7/16] %v1344, 128
    %1505 = vxpose.xlu0.b32.cont [8/16] %v1345, 128
    %1506 = vxpose.xlu0.b32.cont [9/16] %v1346, 128
    %1507 = vxpose.xlu0.b32.cont [10/16] %v1347, 128
    %1508 = vxpose.xlu0.b32.cont [11/16] %v1348, 128
    %1509 = vxpose.xlu0.b32.cont [12/16] %v1349, 128
    %1510 = vxpose.xlu0.b32.cont [13/16] %v1350, 128
    %1511 = vxpose.xlu0.b32.cont [14/16] %v1351, 128
    %1512 = vxpose.xlu0.b32.cont [15/16] %v1352, 128
    %1513 = vxpose.xlu0.b32.end [16/16] %v1353, 128
    %v1514 = vpop.trf.xlu0
    %v1515 = vpop.trf.xlu0
    %v1516 = vpop.trf.xlu0
    %v1517 = vpop.trf.xlu0
    %v1518 = vpop.trf.xlu0
    %v1519 = vpop.trf.xlu0
    %v1520 = vpop.trf.xlu0
    %v1521 = vpop.trf.xlu0
    %v1522 = vpop.trf.xlu0
    %v1523 = vpop.trf.xlu0
    %v1524 = vpop.trf.xlu0
    %v1525 = vpop.trf.xlu0
    %v1526 = vpop.trf.xlu0
    %v1527 = vpop.trf.xlu0
    %v1528 = vpop.trf.xlu0
    %v1529 = vpop.trf.xlu0
    %1530 = vxpose.xlu0.b32.start [1/16] %v1354, 128
    %1531 = vxpose.xlu0.b32.cont [2/16] %v1355, 128
    %1532 = vxpose.xlu0.b32.cont [3/16] %v1356, 128
    %1533 = vxpose.xlu0.b32.cont [4/16] %v1357, 128
    %1534 = vxpose.xlu0.b32.cont [5/16] %v1358, 128
    %1535 = vxpose.xlu0.b32.cont [6/16] %v1359, 128
    %1536 = vxpose.xlu0.b32.cont [7/16] %v1360, 128
    %1537 = vxpose.xlu0.b32.cont [8/16] %v1361, 128
    %1538 = vxpose.xlu0.b32.cont [9/16] %v1362, 128
    %1539 = vxpose.xlu0.b32.cont [10/16] %v1363, 128
    %1540 = vxpose.xlu0.b32.cont [11/16] %v1364, 128
    %1541 = vxpose.xlu0.b32.cont [12/16] %v1365, 128
    %1542 = vxpose.xlu0.b32.cont [13/16] %v1366, 128
    %1543 = vxpose.xlu0.b32.cont [14/16] %v1367, 128
    %1544 = vxpose.xlu0.b32.cont [15/16] %v1368, 128
    %1545 = vxpose.xlu0.b32.end [16/16] %v1369, 128
    %v1546 = vpop.trf.xlu0
    %v1547 = vpop.trf.xlu0
    %v1548 = vpop.trf.xlu0
    %v1549 = vpop.trf.xlu0
    %v1550 = vpop.trf.xlu0
    %v1551 = vpop.trf.xlu0
    %v1552 = vpop.trf.xlu0
    %v1553 = vpop.trf.xlu0
    %v1554 = vpop.trf.xlu0
    %v1555 = vpop.trf.xlu0
    %v1556 = vpop.trf.xlu0
    %v1557 = vpop.trf.xlu0
    %v1558 = vpop.trf.xlu0
    %v1559 = vpop.trf.xlu0
    %v1560 = vpop.trf.xlu0
    %v1561 = vpop.trf.xlu0
    %1562 = vxpose.xlu0.b32.start [1/16] %v1370, 128
    %1563 = vxpose.xlu0.b32.cont [2/16] %v1371, 128
    %1564 = vxpose.xlu0.b32.cont [3/16] %v1372, 128
    %1565 = vxpose.xlu0.b32.cont [4/16] %v1373, 128
    %1566 = vxpose.xlu0.b32.cont [5/16] %v1374, 128
    %1567 = vxpose.xlu0.b32.cont [6/16] %v1375, 128
    %1568 = vxpose.xlu0.b32.cont [7/16] %v1376, 128
    %1569 = vxpose.xlu0.b32.cont [8/16] %v1377, 128
    %1570 = vxpose.xlu0.b32.cont [9/16] %v1378, 128
    %1571 = vxpose.xlu0.b32.cont [10/16] %v1379, 128
    %1572 = vxpose.xlu0.b32.cont [11/16] %v1380, 128
    %1573 = vxpose.xlu0.b32.cont [12/16] %v1381, 128
    %1574 = vxpose.xlu0.b32.cont [13/16] %v1382, 128
    %1575 = vxpose.xlu0.b32.cont [14/16] %v1383, 128
    %1576 = vxpose.xlu0.b32.cont [15/16] %v1384, 128
    %1577 = vxpose.xlu0.b32.end [16/16] %v1385, 128
    %v1578 = vpop.trf.xlu0
    %v1579 = vpop.trf.xlu0
    %v1580 = vpop.trf.xlu0
    %v1581 = vpop.trf.xlu0
    %v1582 = vpop.trf.xlu0
    %v1583 = vpop.trf.xlu0
    %v1584 = vpop.trf.xlu0
    %v1585 = vpop.trf.xlu0
    %v1586 = vpop.trf.xlu0
    %v1587 = vpop.trf.xlu0
    %v1588 = vpop.trf.xlu0
    %v1589 = vpop.trf.xlu0
    %v1590 = vpop.trf.xlu0
    %v1591 = vpop.trf.xlu0
    %v1592 = vpop.trf.xlu0
    %v1593 = vpop.trf.xlu0
    %1594 = vxpose.xlu0.b32.start [1/16] %v1386, 128
    %1595 = vxpose.xlu0.b32.cont [2/16] %v1387, 128
    %1596 = vxpose.xlu0.b32.cont [3/16] %v1388, 128
    %1597 = vxpose.xlu0.b32.cont [4/16] %v1389, 128
    %1598 = vxpose.xlu0.b32.cont [5/16] %v1390, 128
    %1599 = vxpose.xlu0.b32.cont [6/16] %v1391, 128
    %1600 = vxpose.xlu0.b32.cont [7/16] %v1392, 128
    %1601 = vxpose.xlu0.b32.cont [8/16] %v1393, 128
    %1602 = vxpose.xlu0.b32.cont [9/16] %v1394, 128
    %1603 = vxpose.xlu0.b32.cont [10/16] %v1395, 128
    %1604 = vxpose.xlu0.b32.cont [11/16] %v1396, 128
    %1605 = vxpose.xlu0.b32.cont [12/16] %v1397, 128
    %1606 = vxpose.xlu0.b32.cont [13/16] %v1398, 128
    %1607 = vxpose.xlu0.b32.cont [14/16] %v1399, 128
    %1608 = vxpose.xlu0.b32.cont [15/16] %v1400, 128
    %1609 = vxpose.xlu0.b32.end [16/16] %v1401, 128
    %v1610 = vpop.trf.xlu0
    %v1611 = vpop.trf.xlu0
    %v1612 = vpop.trf.xlu0
    %v1613 = vpop.trf.xlu0
    %v1614 = vpop.trf.xlu0
    %v1615 = vpop.trf.xlu0
    %v1616 = vpop.trf.xlu0
    %v1617 = vpop.trf.xlu0
    %v1618 = vpop.trf.xlu0
    %v1619 = vpop.trf.xlu0
    %v1620 = vpop.trf.xlu0
    %v1621 = vpop.trf.xlu0
    %v1622 = vpop.trf.xlu0
    %v1623 = vpop.trf.xlu0
    %v1624 = vpop.trf.xlu0
    %v1625 = vpop.trf.xlu0
    %1626 = vxpose.xlu0.b32.start [1/16] %v1402, 128
    %1627 = vxpose.xlu0.b32.cont [2/16] %v1403, 128
    %1628 = vxpose.xlu0.b32.cont [3/16] %v1404, 128
    %1629 = vxpose.xlu0.b32.cont [4/16] %v1405, 128
    %1630 = vxpose.xlu0.b32.cont [5/16] %v1406, 128
    %1631 = vxpose.xlu0.b32.cont [6/16] %v1407, 128
    %1632 = vxpose.xlu0.b32.cont [7/16] %v1408, 128
    %1633 = vxpose.xlu0.b32.cont [8/16] %v1409, 128
    %1634 = vxpose.xlu0.b32.cont [9/16] %v1410, 128
    %1635 = vxpose.xlu0.b32.cont [10/16] %v1411, 128
    %1636 = vxpose.xlu0.b32.cont [11/16] %v1412, 128
    %1637 = vxpose.xlu0.b32.cont [12/16] %v1413, 128
    %1638 = vxpose.xlu0.b32.cont [13/16] %v1414, 128
    %1639 = vxpose.xlu0.b32.cont [14/16] %v1415, 128
    %1640 = vxpose.xlu0.b32.cont [15/16] %v1416, 128
    %1641 = vxpose.xlu0.b32.end [16/16] %v1417, 128
    %v1642 = vpop.trf.xlu0
    %v1643 = vpop.trf.xlu0
    %v1644 = vpop.trf.xlu0
    %v1645 = vpop.trf.xlu0
    %v1646 = vpop.trf.xlu0
    %v1647 = vpop.trf.xlu0
    %v1648 = vpop.trf.xlu0
    %v1649 = vpop.trf.xlu0
    %v1650 = vpop.trf.xlu0
    %v1651 = vpop.trf.xlu0
    %v1652 = vpop.trf.xlu0
    %v1653 = vpop.trf.xlu0
    %v1654 = vpop.trf.xlu0
    %v1655 = vpop.trf.xlu0
    %v1656 = vpop.trf.xlu0
    %v1657 = vpop.trf.xlu0
    %1658 = vxpose.xlu0.b32.start [1/16] %v1418, 128
    %1659 = vxpose.xlu0.b32.cont [2/16] %v1419, 128
    %1660 = vxpose.xlu0.b32.cont [3/16] %v1420, 128
    %1661 = vxpose.xlu0.b32.cont [4/16] %v1421, 128
    %1662 = vxpose.xlu0.b32.cont [5/16] %v1422, 128
    %1663 = vxpose.xlu0.b32.cont [6/16] %v1423, 128
    %1664 = vxpose.xlu0.b32.cont [7/16] %v1424, 128
    %1665 = vxpose.xlu0.b32.cont [8/16] %v1425, 128
    %1666 = vxpose.xlu0.b32.cont [9/16] %v1426, 128
    %1667 = vxpose.xlu0.b32.cont [10/16] %v1427, 128
    %1668 = vxpose.xlu0.b32.cont [11/16] %v1428, 128
    %1669 = vxpose.xlu0.b32.cont [12/16] %v1429, 128
    %1670 = vxpose.xlu0.b32.cont [13/16] %v1430, 128
    %1671 = vxpose.xlu0.b32.cont [14/16] %v1431, 128
    %1672 = vxpose.xlu0.b32.cont [15/16] %v1432, 128
    %1673 = vxpose.xlu0.b32.end [16/16] %v1433, 128
    %v1674 = vpop.trf.xlu0
    %v1675 = vpop.trf.xlu0
    %v1676 = vpop.trf.xlu0
    %v1677 = vpop.trf.xlu0
    %v1678 = vpop.trf.xlu0
    %v1679 = vpop.trf.xlu0
    %v1680 = vpop.trf.xlu0
    %v1681 = vpop.trf.xlu0
    %v1682 = vpop.trf.xlu0
    %v1683 = vpop.trf.xlu0
    %v1684 = vpop.trf.xlu0
    %v1685 = vpop.trf.xlu0
    %v1686 = vpop.trf.xlu0
    %v1687 = vpop.trf.xlu0
    %v1688 = vpop.trf.xlu0
    %v1689 = vpop.trf.xlu0
    %v1690 = vpack.c.bf16 %v1451, %v1450
    %v1691 = vpack.c.bf16 %v1483, %v1482
    %v1692 = vpack.c.bf16 %v1515, %v1514
    %v1693 = vpack.c.bf16 %v1547, %v1546
    %v1694 = vpack.c.bf16 %v1579, %v1578
    %v1695 = vpack.c.bf16 %v1611, %v1610
    %v1696 = vpack.c.bf16 %v1643, %v1642
    %v1697 = vpack.c.bf16 %v1675, %v1674
    %v1698 = vpack.c.bf16 %v1453, %v1452
    %v1699 = vpack.c.bf16 %v1485, %v1484
    %v1700 = vpack.c.bf16 %v1517, %v1516
    %v1701 = vpack.c.bf16 %v1549, %v1548
    %v1702 = vpack.c.bf16 %v1581, %v1580
    %v1703 = vpack.c.bf16 %v1613, %v1612
    %v1704 = vpack.c.bf16 %v1645, %v1644
    %v1705 = vpack.c.bf16 %v1677, %v1676
    %v1706 = vpack.c.bf16 %v1455, %v1454
    %v1707 = vpack.c.bf16 %v1487, %v1486
    %v1708 = vpack.c.bf16 %v1519, %v1518
    %v1709 = vpack.c.bf16 %v1551, %v1550
    %v1710 = vpack.c.bf16 %v1583, %v1582
    %v1711 = vpack.c.bf16 %v1615, %v1614
    %v1712 = vpack.c.bf16 %v1647, %v1646
    %v1713 = vpack.c.bf16 %v1679, %v1678
    %v1714 = vpack.c.bf16 %v1457, %v1456
    %v1715 = vpack.c.bf16 %v1489, %v1488
    %v1716 = vpack.c.bf16 %v1521, %v1520
    %v1717 = vpack.c.bf16 %v1553, %v1552
    %v1718 = vpack.c.bf16 %v1585, %v1584
    %v1719 = vpack.c.bf16 %v1617, %v1616
    %v1720 = vpack.c.bf16 %v1649, %v1648
    %v1721 = vpack.c.bf16 %v1681, %v1680
    %v1722 = vpack.c.bf16 %v1459, %v1458
    %v1723 = vpack.c.bf16 %v1491, %v1490
    %v1724 = vpack.c.bf16 %v1523, %v1522
    %v1725 = vpack.c.bf16 %v1555, %v1554
    %v1726 = vpack.c.bf16 %v1587, %v1586
    %v1727 = vpack.c.bf16 %v1619, %v1618
    %v1728 = vpack.c.bf16 %v1651, %v1650
    %v1729 = vpack.c.bf16 %v1683, %v1682
    %v1730 = vpack.c.bf16 %v1461, %v1460
    %v1731 = vpack.c.bf16 %v1493, %v1492
    %v1732 = vpack.c.bf16 %v1525, %v1524
    %v1733 = vpack.c.bf16 %v1557, %v1556
    %v1734 = vpack.c.bf16 %v1589, %v1588
    %v1735 = vpack.c.bf16 %v1621, %v1620
    %v1736 = vpack.c.bf16 %v1653, %v1652
    %v1737 = vpack.c.bf16 %v1685, %v1684
    %v1738 = vpack.c.bf16 %v1463, %v1462
    %v1739 = vpack.c.bf16 %v1495, %v1494
    %v1740 = vpack.c.bf16 %v1527, %v1526
    %v1741 = vpack.c.bf16 %v1559, %v1558
    %v1742 = vpack.c.bf16 %v1591, %v1590
    %v1743 = vpack.c.bf16 %v1623, %v1622
    %v1744 = vpack.c.bf16 %v1655, %v1654
    %v1745 = vpack.c.bf16 %v1687, %v1686
    %v1746 = vpack.c.bf16 %v1465, %v1464
    %v1747 = vpack.c.bf16 %v1497, %v1496
    %v1748 = vpack.c.bf16 %v1529, %v1528
    %v1749 = vpack.c.bf16 %v1561, %v1560
    %v1750 = vpack.c.bf16 %v1593, %v1592
    %v1751 = vpack.c.bf16 %v1625, %v1624
    %v1752 = vpack.c.bf16 %v1657, %v1656
    %v1753 = vpack.c.bf16 %v1689, %v1688
    %v1818 = vunpack.c.l.b16 %v1690
    %v1819 = vunpack.c.l.b16 %v1691
    %v1820 = vunpack.c.l.b16 %v1692
    %v1821 = vunpack.c.l.b16 %v1693
    %v1822 = vunpack.c.l.b16 %v1694
    %v1823 = vunpack.c.l.b16 %v1695
    %v1824 = vunpack.c.l.b16 %v1696
    %v1825 = vunpack.c.l.b16 %v1697
    %v1826 = vunpack.c.h.b16 %v1690
    %v1827 = vunpack.c.h.b16 %v1691
    %v1828 = vunpack.c.h.b16 %v1692
    %v1829 = vunpack.c.h.b16 %v1693
    %v1830 = vunpack.c.h.b16 %v1694
    %v1831 = vunpack.c.h.b16 %v1695
    %v1832 = vunpack.c.h.b16 %v1696
    %v1833 = vunpack.c.h.b16 %v1697
    %v1834 = vunpack.c.l.b16 %v1698
    %v1835 = vunpack.c.l.b16 %v1699
    %v1836 = vunpack.c.l.b16 %v1700
    %v1837 = vunpack.c.l.b16 %v1701
    %v1838 = vunpack.c.l.b16 %v1702
    %v1839 = vunpack.c.l.b16 %v1703
    %v1840 = vunpack.c.l.b16 %v1704
    %v1841 = vunpack.c.l.b16 %v1705
    %v1842 = vunpack.c.h.b16 %v1698
    %v1843 = vunpack.c.h.b16 %v1699
    %v1844 = vunpack.c.h.b16 %v1700
    %v1845 = vunpack.c.h.b16 %v1701
    %v1846 = vunpack.c.h.b16 %v1702
    %v1847 = vunpack.c.h.b16 %v1703
    %v1848 = vunpack.c.h.b16 %v1704
    %v1849 = vunpack.c.h.b16 %v1705
    %v1850 = vunpack.c.l.b16 %v1706
    %v1851 = vunpack.c.l.b16 %v1707
    %v1852 = vunpack.c.l.b16 %v1708
    %v1853 = vunpack.c.l.b16 %v1709
    %v1854 = vunpack.c.l.b16 %v1710
    %v1855 = vunpack.c.l.b16 %v1711
    %v1856 = vunpack.c.l.b16 %v1712
    %v1857 = vunpack.c.l.b16 %v1713
    %v1858 = vunpack.c.h.b16 %v1706
    %v1859 = vunpack.c.h.b16 %v1707
    %v1860 = vunpack.c.h.b16 %v1708
    %v1861 = vunpack.c.h.b16 %v1709
    %v1862 = vunpack.c.h.b16 %v1710
    %v1863 = vunpack.c.h.b16 %v1711
    %v1864 = vunpack.c.h.b16 %v1712
    %v1865 = vunpack.c.h.b16 %v1713
    %v1866 = vunpack.c.l.b16 %v1714
    %v1867 = vunpack.c.l.b16 %v1715
    %v1868 = vunpack.c.l.b16 %v1716
    %v1869 = vunpack.c.l.b16 %v1717
    %v1870 = vunpack.c.l.b16 %v1718
    %v1871 = vunpack.c.l.b16 %v1719
    %v1872 = vunpack.c.l.b16 %v1720
    %v1873 = vunpack.c.l.b16 %v1721
    %v1874 = vunpack.c.h.b16 %v1714
    %v1875 = vunpack.c.h.b16 %v1715
    %v1876 = vunpack.c.h.b16 %v1716
    %v1877 = vunpack.c.h.b16 %v1717
    %v1878 = vunpack.c.h.b16 %v1718
    %v1879 = vunpack.c.h.b16 %v1719
    %v1880 = vunpack.c.h.b16 %v1720
    %v1881 = vunpack.c.h.b16 %v1721
    %v1882 = vunpack.c.l.b16 %v1722
    %v1883 = vunpack.c.l.b16 %v1723
    %v1884 = vunpack.c.l.b16 %v1724
    %v1885 = vunpack.c.l.b16 %v1725
    %v1886 = vunpack.c.l.b16 %v1726
    %v1887 = vunpack.c.l.b16 %v1727
    %v1888 = vunpack.c.l.b16 %v1728
    %v1889 = vunpack.c.l.b16 %v1729
    %v1890 = vunpack.c.h.b16 %v1722
    %v1891 = vunpack.c.h.b16 %v1723
    %v1892 = vunpack.c.h.b16 %v1724
    %v1893 = vunpack.c.h.b16 %v1725
    %v1894 = vunpack.c.h.b16 %v1726
    %v1895 = vunpack.c.h.b16 %v1727
    %v1896 = vunpack.c.h.b16 %v1728
    %v1897 = vunpack.c.h.b16 %v1729
    %v1898 = vunpack.c.l.b16 %v1730
    %v1899 = vunpack.c.l.b16 %v1731
    %v1900 = vunpack.c.l.b16 %v1732
    %v1901 = vunpack.c.l.b16 %v1733
    %v1902 = vunpack.c.l.b16 %v1734
    %v1903 = vunpack.c.l.b16 %v1735
    %v1904 = vunpack.c.l.b16 %v1736
    %v1905 = vunpack.c.l.b16 %v1737
    %v1906 = vunpack.c.h.b16 %v1730
    %v1907 = vunpack.c.h.b16 %v1731
    %v1908 = vunpack.c.h.b16 %v1732
    %v1909 = vunpack.c.h.b16 %v1733
    %v1910 = vunpack.c.h.b16 %v1734
    %v1911 = vunpack.c.h.b16 %v1735
    %v1912 = vunpack.c.h.b16 %v1736
    %v1913 = vunpack.c.h.b16 %v1737
    %v1914 = vunpack.c.l.b16 %v1738
    %v1915 = vunpack.c.l.b16 %v1739
    %v1916 = vunpack.c.l.b16 %v1740
    %v1917 = vunpack.c.l.b16 %v1741
    %v1918 = vunpack.c.l.b16 %v1742
    %v1919 = vunpack.c.l.b16 %v1743
    %v1920 = vunpack.c.l.b16 %v1744
    %v1921 = vunpack.c.l.b16 %v1745
    %v1922 = vunpack.c.h.b16 %v1738
    %v1923 = vunpack.c.h.b16 %v1739
    %v1924 = vunpack.c.h.b16 %v1740
    %v1925 = vunpack.c.h.b16 %v1741
    %v1926 = vunpack.c.h.b16 %v1742
    %v1927 = vunpack.c.h.b16 %v1743
    %v1928 = vunpack.c.h.b16 %v1744
    %v1929 = vunpack.c.h.b16 %v1745
    %v1930 = vunpack.c.l.b16 %v1746
    %v1931 = vunpack.c.l.b16 %v1747
    %v1932 = vunpack.c.l.b16 %v1748
    %v1933 = vunpack.c.l.b16 %v1749
    %v1934 = vunpack.c.l.b16 %v1750
    %v1935 = vunpack.c.l.b16 %v1751
    %v1936 = vunpack.c.l.b16 %v1752
    %v1937 = vunpack.c.l.b16 %v1753
    %v1938 = vunpack.c.h.b16 %v1746
    %v1939 = vunpack.c.h.b16 %v1747
    %v1940 = vunpack.c.h.b16 %v1748
    %v1941 = vunpack.c.h.b16 %v1749
    %v1942 = vunpack.c.h.b16 %v1750
    %v1943 = vunpack.c.h.b16 %v1751
    %v1944 = vunpack.c.h.b16 %v1752
    %v1945 = vunpack.c.h.b16 %v1753
    %v1946 = vpack.c.b16 %v1819, %v1818
    %v1947 = vpack.c.b16 %v1821, %v1820
    %v1948 = vpack.c.b16 %v1823, %v1822
    %v1949 = vpack.c.b16 %v1825, %v1824
    %v1950 = vpack.c.b16 %v1827, %v1826
    %v1951 = vpack.c.b16 %v1829, %v1828
    %v1952 = vpack.c.b16 %v1831, %v1830
    %v1953 = vpack.c.b16 %v1833, %v1832
    %v1954 = vpack.c.b16 %v1835, %v1834
    %v1955 = vpack.c.b16 %v1837, %v1836
    %v1956 = vpack.c.b16 %v1839, %v1838
    %v1957 = vpack.c.b16 %v1841, %v1840
    %v1958 = vpack.c.b16 %v1843, %v1842
    %v1959 = vpack.c.b16 %v1845, %v1844
    %v1960 = vpack.c.b16 %v1847, %v1846
    %v1961 = vpack.c.b16 %v1849, %v1848
    %v1962 = vpack.c.b16 %v1851, %v1850
    %v1963 = vpack.c.b16 %v1853, %v1852
    %v1964 = vpack.c.b16 %v1855, %v1854
    %v1965 = vpack.c.b16 %v1857, %v1856
    %v1966 = vpack.c.b16 %v1859, %v1858
    %v1967 = vpack.c.b16 %v1861, %v1860
    %v1968 = vpack.c.b16 %v1863, %v1862
    %v1969 = vpack.c.b16 %v1865, %v1864
    %v1970 = vpack.c.b16 %v1867, %v1866
    %v1971 = vpack.c.b16 %v1869, %v1868
    %v1972 = vpack.c.b16 %v1871, %v1870
    %v1973 = vpack.c.b16 %v1873, %v1872
    %v1974 = vpack.c.b16 %v1875, %v1874
    %v1975 = vpack.c.b16 %v1877, %v1876
    %v1976 = vpack.c.b16 %v1879, %v1878
    %v1977 = vpack.c.b16 %v1881, %v1880
    %v1978 = vpack.c.b16 %v1883, %v1882
    %v1979 = vpack.c.b16 %v1885, %v1884
    %v1980 = vpack.c.b16 %v1887, %v1886
    %v1981 = vpack.c.b16 %v1889, %v1888
    %v1982 = vpack.c.b16 %v1891, %v1890
    %v1983 = vpack.c.b16 %v1893, %v1892
    %v1984 = vpack.c.b16 %v1895, %v1894
    %v1985 = vpack.c.b16 %v1897, %v1896
    %v1986 = vpack.c.b16 %v1899, %v1898
    %v1987 = vpack.c.b16 %v1901, %v1900
    %v1988 = vpack.c.b16 %v1903, %v1902
    %v1989 = vpack.c.b16 %v1905, %v1904
    %v1990 = vpack.c.b16 %v1907, %v1906
    %v1991 = vpack.c.b16 %v1909, %v1908
    %v1992 = vpack.c.b16 %v1911, %v1910
    %v1993 = vpack.c.b16 %v1913, %v1912
    %v1994 = vpack.c.b16 %v1915, %v1914
    %v1995 = vpack.c.b16 %v1917, %v1916
    %v1996 = vpack.c.b16 %v1919, %v1918
    %v1997 = vpack.c.b16 %v1921, %v1920
    %v1998 = vpack.c.b16 %v1923, %v1922
    %v1999 = vpack.c.b16 %v1925, %v1924
    %v2000 = vpack.c.b16 %v1927, %v1926
    %v2001 = vpack.c.b16 %v1929, %v1928
    %v2002 = vpack.c.b16 %v1931, %v1930
    %v2003 = vpack.c.b16 %v1933, %v1932
    %v2004 = vpack.c.b16 %v1935, %v1934
    %v2005 = vpack.c.b16 %v1937, %v1936
    %v2006 = vpack.c.b16 %v1939, %v1938
    %v2007 = vpack.c.b16 %v1941, %v1940
    %v2008 = vpack.c.b16 %v1943, %v1942
    %v2009 = vpack.c.b16 %v1945, %v1944
    %2074 = vst [vmem:[#allocation5] sm:$0xff] %v1946
    %2075 = vst [vmem:[#allocation5 + $0x8] sm:$0xff] %v1947
    %2076 = vst [vmem:[#allocation5 + $0x10] sm:$0xff] %v1948
    %2077 = vst [vmem:[#allocation5 + $0x18] sm:$0xff] %v1949
    %2078 = vst [vmem:[#allocation5 + $0x20] sm:$0xff] %v1950
    %2079 = vst [vmem:[#allocation5 + $0x28] sm:$0xff] %v1951
    %2080 = vst [vmem:[#allocation5 + $0x30] sm:$0xff] %v1952
    %2081 = vst [vmem:[#allocation5 + $0x38] sm:$0xff] %v1953
    %2082 = vst [vmem:[#allocation5 + $0x40] sm:$0xff] %v1954
    %2083 = vst [vmem:[#allocation5 + $0x48] sm:$0xff] %v1955
    %2084 = vst [vmem:[#allocation5 + $0x50] sm:$0xff] %v1956
    %2085 = vst [vmem:[#allocation5 + $0x58] sm:$0xff] %v1957
    %2086 = vst [vmem:[#allocation5 + $0x60] sm:$0xff] %v1958
    %2087 = vst [vmem:[#allocation5 + $0x68] sm:$0xff] %v1959
    %2088 = vst [vmem:[#allocation5 + $0x70] sm:$0xff] %v1960
    %2089 = vst [vmem:[#allocation5 + $0x78] sm:$0xff] %v1961
    %2090 = vst [vmem:[#allocation5 + $0x80] sm:$0xff] %v1962
    %2091 = vst [vmem:[#allocation5 + $0x88] sm:$0xff] %v1963
    %2092 = vst [vmem:[#allocation5 + $0x90] sm:$0xff] %v1964
    %2093 = vst [vmem:[#allocation5 + $0x98] sm:$0xff] %v1965
    %2094 = vst [vmem:[#allocation5 + $0xa0] sm:$0xff] %v1966
    %2095 = vst [vmem:[#allocation5 + $0xa8] sm:$0xff] %v1967
    %2096 = vst [vmem:[#allocation5 + $0xb0] sm:$0xff] %v1968
    %2097 = vst [vmem:[#allocation5 + $0xb8] sm:$0xff] %v1969
    %2098 = vst [vmem:[#allocation5 + $0xc0] sm:$0xff] %v1970
    %2099 = vst [vmem:[#allocation5 + $0xc8] sm:$0xff] %v1971
    %2100 = vst [vmem:[#allocation5 + $0xd0] sm:$0xff] %v1972
    %2101 = vst [vmem:[#allocation5 + $0xd8] sm:$0xff] %v1973
    %2102 = vst [vmem:[#allocation5 + $0xe0] sm:$0xff] %v1974
    %2103 = vst [vmem:[#allocation5 + $0xe8] sm:$0xff] %v1975
    %2104 = vst [vmem:[#allocation5 + $0xf0] sm:$0xff] %v1976
    %2105 = vst [vmem:[#allocation5 + $0xf8] sm:$0xff] %v1977
    %2106 = vst [vmem:[#allocation5 + $0x100] sm:$0xff] %v1978
    %2107 = vst [vmem:[#allocation5 + $0x108] sm:$0xff] %v1979
    %2108 = vst [vmem:[#allocation5 + $0x110] sm:$0xff] %v1980
    %2109 = vst [vmem:[#allocation5 + $0x118] sm:$0xff] %v1981
    %2110 = vst [vmem:[#allocation5 + $0x120] sm:$0xff] %v1982
    %2111 = vst [vmem:[#allocation5 + $0x128] sm:$0xff] %v1983
    %2112 = vst [vmem:[#allocation5 + $0x130] sm:$0xff] %v1984
    %2113 = vst [vmem:[#allocation5 + $0x138] sm:$0xff] %v1985
    %2114 = vst [vmem:[#allocation5 + $0x140] sm:$0xff] %v1986
    %2115 = vst [vmem:[#allocation5 + $0x148] sm:$0xff] %v1987
    %2116 = vst [vmem:[#allocation5 + $0x150] sm:$0xff] %v1988
    %2117 = vst [vmem:[#allocation5 + $0x158] sm:$0xff] %v1989
    %2118 = vst [vmem:[#allocation5 + $0x160] sm:$0xff] %v1990
    %2119 = vst [vmem:[#allocation5 + $0x168] sm:$0xff] %v1991
    %2120 = vst [vmem:[#allocation5 + $0x170] sm:$0xff] %v1992
    %2121 = vst [vmem:[#allocation5 + $0x178] sm:$0xff] %v1993
    %2122 = vst [vmem:[#allocation5 + $0x180] sm:$0xff] %v1994
    %2123 = vst [vmem:[#allocation5 + $0x188] sm:$0xff] %v1995
    %2124 = vst [vmem:[#allocation5 + $0x190] sm:$0xff] %v1996
    %2125 = vst [vmem:[#allocation5 + $0x198] sm:$0xff] %v1997
    %2126 = vst [vmem:[#allocation5 + $0x1a0] sm:$0xff] %v1998
    %2127 = vst [vmem:[#allocation5 + $0x1a8] sm:$0xff] %v1999
    %2128 = vst [vmem:[#allocation5 + $0x1b0] sm:$0xff] %v2000
    %2129 = vst [vmem:[#allocation5 + $0x1b8] sm:$0xff] %v2001
    %2130 = vst [vmem:[#allocation5 + $0x1c0] sm:$0xff] %v2002
    %2131 = vst [vmem:[#allocation5 + $0x1c8] sm:$0xff] %v2003
    %2132 = vst [vmem:[#allocation5 + $0x1d0] sm:$0xff] %v2004
    %2133 = vst [vmem:[#allocation5 + $0x1d8] sm:$0xff] %v2005
    %2134 = vst [vmem:[#allocation5 + $0x1e0] sm:$0xff] %v2006
    %2135 = vst [vmem:[#allocation5 + $0x1e8] sm:$0xff] %v2007
    %2136 = vst [vmem:[#allocation5 + $0x1f0] sm:$0xff] %v2008
    %2137 = vst [vmem:[#allocation5 + $0x1f8] sm:$0xff] %v2009
    // Predicated region
    $region10: #{tpu_custom_call.1} parent=1 // pred_check
      _
    $region11: #{tpu_custom_call.1} parent=1 // pred_check_branch
      %2139 = sbr.rel (0) target = $region13
    $region12: #{tpu_custom_call.1} parent=1 // pred_region
      %s2141 = ssub.s32 8192, 8192
      %2142 = vsyncadd [#allocation4], %s2141
      %s2143 = sshll.u32 [#allocation5], 4
      %s2144 = int_to_ptr.vmem [resolvable:$true] %s2143
      %2149 = dma.vmem_to_hbm [thread:$0]  %s2144, 8192, %s1, [#allocation4], 512, 512, 32
    $region13: #{tpu_custom_call.1} parent=1 // pred_fallthru
      _
    // Predicated region
    $region14: #{tpu_custom_call.1} parent=1 // pred_check
      _
    $region15: #{tpu_custom_call.1} parent=1 // pred_check_branch
      %2151 = sbr.rel (0) target = $region17
    $region16: #{tpu_custom_call.1} parent=1 // pred_region
      %2152 = dma.done [#allocation4], 8192
    $region17: #{tpu_custom_call.1} parent=1 // pred_fallthru
      _
    %2153 = vsyncpa [#allocation3], 1
    %2154 = vsyncpa [#allocation4], 1

</llo_original>
